<compile_context>
chip_gen: v7x
topology: tpu7x:2x2x1
jax: 0.10.0
libtpu: 0.0.40
codegen_flags: <defaults>
</compile_context>

<pallas_src>
import functools

import jax
import jax.numpy as jnp
import numpy as np
from jax.experimental import pallas as pl
from jax.experimental.pallas import tpu as pltpu


# ---------------------------------------------------------------------------
# Pallas kernel: VIN forward for one lane-packed batch block
# ---------------------------------------------------------------------------
def vin_kernel(x_ref, whr_ref, wq_ref, ww_ref, qrb_ref, v_ref, *,
               k, l_i, l_q, lanes, shifts):
    """Refs:
      x_ref   : [l_i, lanes]      input images, pixels (+batch) in lanes
      whr_ref : [9*l_i, lanes]    mask-folded (h∘r) 3x3 weight planes
      wq_ref  : [9*l_q, lanes]    mask-folded q-conv weight planes
      ww_ref  : [9*l_q, lanes]    mask-folded w-conv weight planes
      qrb_ref : [l_q, lanes]      bias contribution of r to qr (precomputed)
      v_ref   : [1, lanes]        output value map
    """
    def tap(a, s):
        # Shift so destination pixel p reads source pixel p+s; wrapped lanes
        # are killed by the zeroed boundary weights in the folded planes.
        if s == 0:
            return a
        return pltpu.roll(a, shift=(-s) % lanes, axis=1)

    x = x_ref[...]                                            # [l_i, lanes]

    # --- r = Conv3x3(x, W_hr)  (bias contribution folded into qrb) ---------
    r = jnp.zeros((1, lanes), jnp.float32)
    for t in range(9):
        w = whr_ref[pl.ds(t * l_i, l_i), :]                   # [l_i, lanes]
        r = r + jnp.sum(w * tap(x, shifts[t]), axis=0, keepdims=True)

    # --- qr = Conv3x3(r, wq) + b_r-contribution  (hoisted, loop invariant) --
    qr = qrb_ref[...]                                         # [l_q, lanes]
    for t in range(9):
        wp = wq_ref[pl.ds(t * l_q, l_q), :]                   # [l_q, lanes]
        qr = qr + wp * tap(r, shifts[t])

    # --- value iteration -----------------------------------------------------
    v = jnp.max(qr, axis=0, keepdims=True)                    # first q = conv(r, wq)
    for _ in range(k - 1):
        q = qr
        for t in range(9):
            wp = ww_ref[pl.ds(t * l_q, l_q), :]               # streamed per tap
            q = q + wp * tap(v, shifts[t])
        v = jnp.max(q, axis=0, keepdims=True)                 # [1, lanes]

    v_ref[...] = v.astype(v_ref.dtype)


# ---------------------------------------------------------------------------
# Wrapper
# ---------------------------------------------------------------------------
def vin_forward(x_nchw, wh, bh, wr, wq, ww, *, k, target_lanes=2048):
    """x_nchw: [N, l_i, H, W] (PyTorch layout). Returns v: [N, H, W]."""
    x = x_nchw.astype(jnp.float32)
    N, l_i, H, W = x.shape
    HW = H * W
    l_q = wq.shape[-1]

    # ---- pick how many images to pack into the lane axis per grid step ----
    bb = max(1, min(N, max(1, target_lanes // HW)))
    while bb > 1 and N % bb != 0:
        bb -= 1
    if N >= 2 and N // bb < 2:           # keep >=2 grid steps (v7x: 2 TCs)
        bb = max(1, bb // 2)
        while bb > 1 and N % bb != 0:
            bb -= 1
    if HW % 128 != 0:
        # blocked lane dim must be a multiple of 128; fall back to one block
        # covering the whole array (block == full dims is always allowed).
        bb = N
    lanes = bb * HW
    G = N // bb

    # ---- fold the 1x1 r-conv into the 3x3 h-conv (no nonlinearity between) -
    wh32 = wh.astype(jnp.float32)
    wr32 = wr.astype(jnp.float32)
    w_hr = jnp.einsum('hwij,jo->hwio', wh32, wr32)[..., 0]     # [3, 3, l_i]
    whr_t = w_hr.reshape(9, l_i).T                             # [l_i, 9]
    b_r = (bh.astype(jnp.float32) @ wr32)[0, 0]                # scalar

    wq_t = wq.astype(jnp.float32).reshape(9, l_q).T            # [l_q, 9]
    ww_t = ww.astype(jnp.float32).reshape(9, l_q).T            # [l_q, 9]

    # ---- per-tap boundary masks, tiled across the packed batch block -------
    yy, xx = np.meshgrid(np.arange(H), np.arange(W), indexing='ij')
    shifts, mask_rows = [], []
    for dy in range(3):
        for dx in range(3):
            shifts.append((dy - 1) * W + (dx - 1))
            m = ((yy + dy - 1 >= 0) & (yy + dy - 1 < H) &
                 (xx + dx - 1 >= 0) & (xx + dx - 1 < W))
            mask_rows.append(m.reshape(-1).astype(np.float32))
    masks_np = np.stack(mask_rows, axis=0)                     # [9, HW]
    mask_lane = jnp.asarray(np.tile(masks_np, (1, bb)))        # [9, lanes]

    # ---- mask-folded per-tap weight planes (built once in the wrapper) -----
    whr_planes = (whr_t.T[:, :, None] * mask_lane[:, None, :]).reshape(9 * l_i, lanes)
    wq_planes = (wq_t.T[:, :, None] * mask_lane[:, None, :]).reshape(9 * l_q, lanes)
    ww_planes = (ww_t.T[:, :, None] * mask_lane[:, None, :]).reshape(9 * l_q, lanes)
    # bias contribution of r to qr: b_r * sum_t wq[a,t]*mask[t,p]
    qr_bias = b_r * jnp.einsum('qt,tx->qx', wq_t, mask_lane)   # [l_q, lanes]

    # ---- lane-packed activations: [l_i, N*HW] -------------------------------
    x_slab = jnp.transpose(x, (1, 0, 2, 3)).reshape(l_i, N * HW)

    kernel = functools.partial(vin_kernel, k=k, l_i=l_i, l_q=l_q,
                               lanes=lanes, shifts=tuple(shifts))
    out = pl.pallas_call(
        kernel,
        out_shape=jax.ShapeDtypeStruct((1, N * HW), jnp.float32),
        grid_spec=pltpu.PrefetchScalarGridSpec(
            num_scalar_prefetch=0,
            grid=(G,),
            in_specs=[
                pl.BlockSpec((l_i, lanes), lambda b: (0, b)),
                pl.BlockSpec((9 * l_i, lanes), lambda b: (0, 0)),
                pl.BlockSpec((9 * l_q, lanes), lambda b: (0, 0)),
                pl.BlockSpec((9 * l_q, lanes), lambda b: (0, 0)),
                pl.BlockSpec((l_q, lanes), lambda b: (0, 0)),
            ],
            out_specs=pl.BlockSpec((1, lanes), lambda b: (0, b)),
        ),
        compiler_params=pltpu.CompilerParams(
            dimension_semantics=("parallel",)),
    )(x_slab, whr_planes, wq_planes, ww_planes, qr_bias)
    return out.reshape(N, H, W)


# ---------------------------------------------------------------------------
# Pure-JAX reference (for correctness check)
# ---------------------------------------------------------------------------
def vin_reference(x_nchw, wh, bh, wr, wq, ww, *, k):
    x = jnp.transpose(x_nchw, (0, 2, 3, 1)).astype(jnp.float32)

    def conv(inp, w):
        return jax.lax.conv_general_dilated(
            inp, w, window_strides=(1, 1), padding="SAME",
            dimension_numbers=("NHWC", "HWIO", "NHWC"),
            precision=jax.lax.Precision.HIGHEST)

    h = conv(x, wh) + bh.reshape(1, 1, 1, -1)
    r = conv(h, wr.reshape(1, 1, wr.shape[0], 1))
    q = conv(r, wq)
    v = jnp.max(q, axis=-1, keepdims=True)
    wcat = jnp.concatenate([wq, ww], axis=2)          # [3, 3, 2, l_q]
    for _ in range(k - 1):
        q = conv(jnp.concatenate([r, v], axis=-1), wcat)
        v = jnp.max(q, axis=-1, keepdims=True)
    return v[..., 0]


# ---------------------------------------------------------------------------
if __name__ == "__main__":
    # config: l_i=2 input channels, l_h=16 hidden, l_q=4 actions, k=5 iters
    N, H, W = 2, 16, 16
    l_i, l_h, l_q, k = 2, 16, 4, 5

    key = jax.random.PRNGKey(0)
    kx, k1, k2, k3, k4, k5 = jax.random.split(key, 6)

    x = jax.random.normal(kx, (N, l_i, H, W), dtype=jnp.float32)   # NCHW input

    # Deterministic synthetic parameters (HWIO conv weights).
    # Note: the PyTorch module initializes self.w to zeros; we use small random
    # values so the value-iteration path is exercised non-trivially.
    wh = 0.1 * jax.random.normal(k1, (3, 3, l_i, l_h), dtype=jnp.float32)
    bh = 0.1 * jax.random.normal(k2, (1, l_h), dtype=jnp.float32)
    wr = 0.1 * jax.random.normal(k3, (l_h, 1), dtype=jnp.float32)
    wq = 0.1 * jax.random.normal(k4, (3, 3, 1, l_q), dtype=jnp.float32)
    ww = 0.1 * jax.random.normal(k5, (3, 3, 1, l_q), dtype=jnp.float32)

    v = vin_forward(x, wh, bh, wr, wq, ww, k=k)
    v = jax.block_until_ready(v)

    v_ref = jax.block_until_ready(vin_reference(x, wh, bh, wr, wq, ww, k=k))
    np.testing.assert_allclose(np.asarray(v), np.asarray(v_ref),
                               rtol=1e-2, atol=1e-2)

    print("KERNEL_OK")
</pallas_src>

<mosaic_0001>
module attributes {stable_mosaic.version = 11 : i64} {
  func.func @vin_kernel(%arg0: i32, %arg1: memref<2x256xf32, #tpu.memory_space<vmem>>, %arg2: memref<18x256xf32, #tpu.memory_space<vmem>>, %arg3: memref<36x256xf32, #tpu.memory_space<vmem>>, %arg4: memref<36x256xf32, #tpu.memory_space<vmem>>, %arg5: memref<4x256xf32, #tpu.memory_space<vmem>>, %arg6: memref<1x256xf32, #tpu.memory_space<vmem>>) attributes {dimension_semantics = [#tpu.dimension_semantics<parallel>], iteration_bounds = array<i64: 2>, scalar_prefetch = 0 : i64, scratch_operands = 0 : i64, tpu.core_type = #tpu.core_type<tc>, window_params = [{transform_indices = @transform_0, window_bounds = array<i64: 2, 256>}, {pipeline_mode = #tpu.pipeline_mode<synchronous>, transform_indices = @transform_1, window_bounds = array<i64: 18, 256>}, {pipeline_mode = #tpu.pipeline_mode<synchronous>, transform_indices = @transform_2, window_bounds = array<i64: 36, 256>}, {pipeline_mode = #tpu.pipeline_mode<synchronous>, transform_indices = @transform_3, window_bounds = array<i64: 36, 256>}, {pipeline_mode = #tpu.pipeline_mode<synchronous>, transform_indices = @transform_4, window_bounds = array<i64: 4, 256>}, {transform_indices = @transform_5, window_bounds = array<i64: 1, 256>}]} {
    %c0 = arith.constant 0 : index
    %c0_0 = arith.constant 0 : index
    %0 = vector.load %arg1[%c0, %c0_0] : memref<2x256xf32, #tpu.memory_space<vmem>>, vector<2x256xf32>
    %cst = arith.constant 0.000000e+00 : f32
    %1 = vector.broadcast %cst : f32 to vector<1x256xf32>
    %c0_1 = arith.constant 0 : index
    %c0_2 = arith.constant 0 : index
    %2 = vector.load %arg2[%c0_1, %c0_2] : memref<18x256xf32, #tpu.memory_space<vmem>>, vector<2x256xf32>
    %c17_i32 = arith.constant 17 : i32
    %3 = tpu.dynamic_rotate %0 by %c17_i32 dim 1 : vector<2x256xf32>, i32 -> vector<2x256xf32>
    %4 = arith.mulf %2, %3 : vector<2x256xf32>
    %cst_3 = arith.constant dense<0.000000e+00> : vector<256xf32>
    %5 = vector.multi_reduction <add>, %4, %cst_3 [0] : vector<2x256xf32> to vector<256xf32>
    %6 = vector.shape_cast %5 : vector<256xf32> to vector<1x256xf32>
    %7 = arith.addf %1, %6 : vector<1x256xf32>
    %c2 = arith.constant 2 : index
    %c0_4 = arith.constant 0 : index
    %8 = vector.load %arg2[%c2, %c0_4] : memref<18x256xf32, #tpu.memory_space<vmem>>, vector<2x256xf32>
    %c16_i32 = arith.constant 16 : i32
    %9 = tpu.dynamic_rotate %0 by %c16_i32 dim 1 : vector<2x256xf32>, i32 -> vector<2x256xf32>
    %10 = arith.mulf %8, %9 : vector<2x256xf32>
    %cst_5 = arith.constant dense<0.000000e+00> : vector<256xf32>
    %11 = vector.multi_reduction <add>, %10, %cst_5 [0] : vector<2x256xf32> to vector<256xf32>
    %12 = vector.shape_cast %11 : vector<256xf32> to vector<1x256xf32>
    %13 = arith.addf %7, %12 : vector<1x256xf32>
    %c4 = arith.constant 4 : index
    %c0_6 = arith.constant 0 : index
    %14 = vector.load %arg2[%c4, %c0_6] : memref<18x256xf32, #tpu.memory_space<vmem>>, vector<2x256xf32>
    %c15_i32 = arith.constant 15 : i32
    %15 = tpu.dynamic_rotate %0 by %c15_i32 dim 1 : vector<2x256xf32>, i32 -> vector<2x256xf32>
    %16 = arith.mulf %14, %15 : vector<2x256xf32>
    %cst_7 = arith.constant dense<0.000000e+00> : vector<256xf32>
    %17 = vector.multi_reduction <add>, %16, %cst_7 [0] : vector<2x256xf32> to vector<256xf32>
    %18 = vector.shape_cast %17 : vector<256xf32> to vector<1x256xf32>
    %19 = arith.addf %13, %18 : vector<1x256xf32>
    %c6 = arith.constant 6 : index
    %c0_8 = arith.constant 0 : index
    %20 = vector.load %arg2[%c6, %c0_8] : memref<18x256xf32, #tpu.memory_space<vmem>>, vector<2x256xf32>
    %c1_i32 = arith.constant 1 : i32
    %21 = tpu.dynamic_rotate %0 by %c1_i32 dim 1 : vector<2x256xf32>, i32 -> vector<2x256xf32>
    %22 = arith.mulf %20, %21 : vector<2x256xf32>
    %cst_9 = arith.constant dense<0.000000e+00> : vector<256xf32>
    %23 = vector.multi_reduction <add>, %22, %cst_9 [0] : vector<2x256xf32> to vector<256xf32>
    %24 = vector.shape_cast %23 : vector<256xf32> to vector<1x256xf32>
    %25 = arith.addf %19, %24 : vector<1x256xf32>
    %c8 = arith.constant 8 : index
    %c0_10 = arith.constant 0 : index
    %26 = vector.load %arg2[%c8, %c0_10] : memref<18x256xf32, #tpu.memory_space<vmem>>, vector<2x256xf32>
    %27 = arith.mulf %26, %0 : vector<2x256xf32>
    %cst_11 = arith.constant dense<0.000000e+00> : vector<256xf32>
    %28 = vector.multi_reduction <add>, %27, %cst_11 [0] : vector<2x256xf32> to vector<256xf32>
    %29 = vector.shape_cast %28 : vector<256xf32> to vector<1x256xf32>
    %30 = arith.addf %25, %29 : vector<1x256xf32>
    %c10 = arith.constant 10 : index
    %c0_12 = arith.constant 0 : index
    %31 = vector.load %arg2[%c10, %c0_12] : memref<18x256xf32, #tpu.memory_space<vmem>>, vector<2x256xf32>
    %c255_i32 = arith.constant 255 : i32
    %32 = tpu.dynamic_rotate %0 by %c255_i32 dim 1 : vector<2x256xf32>, i32 -> vector<2x256xf32>
    %33 = arith.mulf %31, %32 : vector<2x256xf32>
    %cst_13 = arith.constant dense<0.000000e+00> : vector<256xf32>
    %34 = vector.multi_reduction <add>, %33, %cst_13 [0] : vector<2x256xf32> to vector<256xf32>
    %35 = vector.shape_cast %34 : vector<256xf32> to vector<1x256xf32>
    %36 = arith.addf %30, %35 : vector<1x256xf32>
    %c12 = arith.constant 12 : index
    %c0_14 = arith.constant 0 : index
    %37 = vector.load %arg2[%c12, %c0_14] : memref<18x256xf32, #tpu.memory_space<vmem>>, vector<2x256xf32>
    %c241_i32 = arith.constant 241 : i32
    %38 = tpu.dynamic_rotate %0 by %c241_i32 dim 1 : vector<2x256xf32>, i32 -> vector<2x256xf32>
    %39 = arith.mulf %37, %38 : vector<2x256xf32>
    %cst_15 = arith.constant dense<0.000000e+00> : vector<256xf32>
    %40 = vector.multi_reduction <add>, %39, %cst_15 [0] : vector<2x256xf32> to vector<256xf32>
    %41 = vector.shape_cast %40 : vector<256xf32> to vector<1x256xf32>
    %42 = arith.addf %36, %41 : vector<1x256xf32>
    %c14 = arith.constant 14 : index
    %c0_16 = arith.constant 0 : index
    %43 = vector.load %arg2[%c14, %c0_16] : memref<18x256xf32, #tpu.memory_space<vmem>>, vector<2x256xf32>
    %c240_i32 = arith.constant 240 : i32
    %44 = tpu.dynamic_rotate %0 by %c240_i32 dim 1 : vector<2x256xf32>, i32 -> vector<2x256xf32>
    %45 = arith.mulf %43, %44 : vector<2x256xf32>
    %cst_17 = arith.constant dense<0.000000e+00> : vector<256xf32>
    %46 = vector.multi_reduction <add>, %45, %cst_17 [0] : vector<2x256xf32> to vector<256xf32>
    %47 = vector.shape_cast %46 : vector<256xf32> to vector<1x256xf32>
    %48 = arith.addf %42, %47 : vector<1x256xf32>
    %c16 = arith.constant 16 : index
    %c0_18 = arith.constant 0 : index
    %49 = vector.load %arg2[%c16, %c0_18] : memref<18x256xf32, #tpu.memory_space<vmem>>, vector<2x256xf32>
    %c239_i32 = arith.constant 239 : i32
    %50 = tpu.dynamic_rotate %0 by %c239_i32 dim 1 : vector<2x256xf32>, i32 -> vector<2x256xf32>
    %51 = arith.mulf %49, %50 : vector<2x256xf32>
    %cst_19 = arith.constant dense<0.000000e+00> : vector<256xf32>
    %52 = vector.multi_reduction <add>, %51, %cst_19 [0] : vector<2x256xf32> to vector<256xf32>
    %53 = vector.shape_cast %52 : vector<256xf32> to vector<1x256xf32>
    %54 = arith.addf %48, %53 : vector<1x256xf32>
    %c0_20 = arith.constant 0 : index
    %c0_21 = arith.constant 0 : index
    %55 = vector.load %arg5[%c0_20, %c0_21] : memref<4x256xf32, #tpu.memory_space<vmem>>, vector<4x256xf32>
    %c0_22 = arith.constant 0 : index
    %c0_23 = arith.constant 0 : index
    %56 = vector.load %arg3[%c0_22, %c0_23] : memref<36x256xf32, #tpu.memory_space<vmem>>, vector<4x256xf32>
    %c17_i32_24 = arith.constant 17 : i32
    %57 = tpu.dynamic_rotate %54 by %c17_i32_24 dim 1 : vector<1x256xf32>, i32 -> vector<1x256xf32>
    %58 = vector.broadcast %57 : vector<1x256xf32> to vector<4x256xf32>
    %59 = arith.mulf %56, %58 : vector<4x256xf32>
    %60 = arith.addf %55, %59 : vector<4x256xf32>
    %c4_25 = arith.constant 4 : index
    %c0_26 = arith.constant 0 : index
    %61 = vector.load %arg3[%c4_25, %c0_26] : memref<36x256xf32, #tpu.memory_space<vmem>>, vector<4x256xf32>
    %c16_i32_27 = arith.constant 16 : i32
    %62 = tpu.dynamic_rotate %54 by %c16_i32_27 dim 1 : vector<1x256xf32>, i32 -> vector<1x256xf32>
    %63 = vector.broadcast %62 : vector<1x256xf32> to vector<4x256xf32>
    %64 = arith.mulf %61, %63 : vector<4x256xf32>
    %65 = arith.addf %60, %64 : vector<4x256xf32>
    %c8_28 = arith.constant 8 : index
    %c0_29 = arith.constant 0 : index
    %66 = vector.load %arg3[%c8_28, %c0_29] : memref<36x256xf32, #tpu.memory_space<vmem>>, vector<4x256xf32>
    %c15_i32_30 = arith.constant 15 : i32
    %67 = tpu.dynamic_rotate %54 by %c15_i32_30 dim 1 : vector<1x256xf32>, i32 -> vector<1x256xf32>
    %68 = vector.broadcast %67 : vector<1x256xf32> to vector<4x256xf32>
    %69 = arith.mulf %66, %68 : vector<4x256xf32>
    %70 = arith.addf %65, %69 : vector<4x256xf32>
    %c12_31 = arith.constant 12 : index
    %c0_32 = arith.constant 0 : index
    %71 = vector.load %arg3[%c12_31, %c0_32] : memref<36x256xf32, #tpu.memory_space<vmem>>, vector<4x256xf32>
    %c1_i32_33 = arith.constant 1 : i32
    %72 = tpu.dynamic_rotate %54 by %c1_i32_33 dim 1 : vector<1x256xf32>, i32 -> vector<1x256xf32>
    %73 = vector.broadcast %72 : vector<1x256xf32> to vector<4x256xf32>
    %74 = arith.mulf %71, %73 : vector<4x256xf32>
    %75 = arith.addf %70, %74 : vector<4x256xf32>
    %c16_34 = arith.constant 16 : index
    %c0_35 = arith.constant 0 : index
    %76 = vector.load %arg3[%c16_34, %c0_35] : memref<36x256xf32, #tpu.memory_space<vmem>>, vector<4x256xf32>
    %77 = vector.broadcast %54 : vector<1x256xf32> to vector<4x256xf32>
    %78 = arith.mulf %76, %77 : vector<4x256xf32>
    %79 = arith.addf %75, %78 : vector<4x256xf32>
    %c20 = arith.constant 20 : index
    %c0_36 = arith.constant 0 : index
    %80 = vector.load %arg3[%c20, %c0_36] : memref<36x256xf32, #tpu.memory_space<vmem>>, vector<4x256xf32>
    %c255_i32_37 = arith.constant 255 : i32
    %81 = tpu.dynamic_rotate %54 by %c255_i32_37 dim 1 : vector<1x256xf32>, i32 -> vector<1x256xf32>
    %82 = vector.broadcast %81 : vector<1x256xf32> to vector<4x256xf32>
    %83 = arith.mulf %80, %82 : vector<4x256xf32>
    %84 = arith.addf %79, %83 : vector<4x256xf32>
    %c24 = arith.constant 24 : index
    %c0_38 = arith.constant 0 : index
    %85 = vector.load %arg3[%c24, %c0_38] : memref<36x256xf32, #tpu.memory_space<vmem>>, vector<4x256xf32>
    %c241_i32_39 = arith.constant 241 : i32
    %86 = tpu.dynamic_rotate %54 by %c241_i32_39 dim 1 : vector<1x256xf32>, i32 -> vector<1x256xf32>
    %87 = vector.broadcast %86 : vector<1x256xf32> to vector<4x256xf32>
    %88 = arith.mulf %85, %87 : vector<4x256xf32>
    %89 = arith.addf %84, %88 : vector<4x256xf32>
    %c28 = arith.constant 28 : index
    %c0_40 = arith.constant 0 : index
    %90 = vector.load %arg3[%c28, %c0_40] : memref<36x256xf32, #tpu.memory_space<vmem>>, vector<4x256xf32>
    %c240_i32_41 = arith.constant 240 : i32
    %91 = tpu.dynamic_rotate %54 by %c240_i32_41 dim 1 : vector<1x256xf32>, i32 -> vector<1x256xf32>
    %92 = vector.broadcast %91 : vector<1x256xf32> to vector<4x256xf32>
    %93 = arith.mulf %90, %92 : vector<4x256xf32>
    %94 = arith.addf %89, %93 : vector<4x256xf32>
    %c32 = arith.constant 32 : index
    %c0_42 = arith.constant 0 : index
    %95 = vector.load %arg3[%c32, %c0_42] : memref<36x256xf32, #tpu.memory_space<vmem>>, vector<4x256xf32>
    %c239_i32_43 = arith.constant 239 : i32
    %96 = tpu.dynamic_rotate %54 by %c239_i32_43 dim 1 : vector<1x256xf32>, i32 -> vector<1x256xf32>
    %97 = vector.broadcast %96 : vector<1x256xf32> to vector<4x256xf32>
    %98 = arith.mulf %95, %97 : vector<4x256xf32>
    %99 = arith.addf %94, %98 : vector<4x256xf32>
    %cst_44 = arith.constant dense<0xFF800000> : vector<256xf32>
    %100 = vector.multi_reduction <maximumf>, %99, %cst_44 [0] : vector<4x256xf32> to vector<256xf32>
    %101 = vector.shape_cast %100 : vector<256xf32> to vector<1x256xf32>
    %c0_45 = arith.constant 0 : index
    %c0_46 = arith.constant 0 : index
    %102 = vector.load %arg4[%c0_45, %c0_46] : memref<36x256xf32, #tpu.memory_space<vmem>>, vector<4x256xf32>
    %c17_i32_47 = arith.constant 17 : i32
    %103 = tpu.dynamic_rotate %101 by %c17_i32_47 dim 1 : vector<1x256xf32>, i32 -> vector<1x256xf32>
    %104 = vector.broadcast %103 : vector<1x256xf32> to vector<4x256xf32>
    %105 = arith.mulf %102, %104 : vector<4x256xf32>
    %106 = arith.addf %99, %105 : vector<4x256xf32>
    %c4_48 = arith.constant 4 : index
    %c0_49 = arith.constant 0 : index
    %107 = vector.load %arg4[%c4_48, %c0_49] : memref<36x256xf32, #tpu.memory_space<vmem>>, vector<4x256xf32>
    %c16_i32_50 = arith.constant 16 : i32
    %108 = tpu.dynamic_rotate %101 by %c16_i32_50 dim 1 : vector<1x256xf32>, i32 -> vector<1x256xf32>
    %109 = vector.broadcast %108 : vector<1x256xf32> to vector<4x256xf32>
    %110 = arith.mulf %107, %109 : vector<4x256xf32>
    %111 = arith.addf %106, %110 : vector<4x256xf32>
    %c8_51 = arith.constant 8 : index
    %c0_52 = arith.constant 0 : index
    %112 = vector.load %arg4[%c8_51, %c0_52] : memref<36x256xf32, #tpu.memory_space<vmem>>, vector<4x256xf32>
    %c15_i32_53 = arith.constant 15 : i32
    %113 = tpu.dynamic_rotate %101 by %c15_i32_53 dim 1 : vector<1x256xf32>, i32 -> vector<1x256xf32>
    %114 = vector.broadcast %113 : vector<1x256xf32> to vector<4x256xf32>
    %115 = arith.mulf %112, %114 : vector<4x256xf32>
    %116 = arith.addf %111, %115 : vector<4x256xf32>
    %c12_54 = arith.constant 12 : index
    %c0_55 = arith.constant 0 : index
    %117 = vector.load %arg4[%c12_54, %c0_55] : memref<36x256xf32, #tpu.memory_space<vmem>>, vector<4x256xf32>
    %c1_i32_56 = arith.constant 1 : i32
    %118 = tpu.dynamic_rotate %101 by %c1_i32_56 dim 1 : vector<1x256xf32>, i32 -> vector<1x256xf32>
    %119 = vector.broadcast %118 : vector<1x256xf32> to vector<4x256xf32>
    %120 = arith.mulf %117, %119 : vector<4x256xf32>
    %121 = arith.addf %116, %120 : vector<4x256xf32>
    %c16_57 = arith.constant 16 : index
    %c0_58 = arith.constant 0 : index
    %122 = vector.load %arg4[%c16_57, %c0_58] : memref<36x256xf32, #tpu.memory_space<vmem>>, vector<4x256xf32>
    %123 = vector.broadcast %101 : vector<1x256xf32> to vector<4x256xf32>
    %124 = arith.mulf %122, %123 : vector<4x256xf32>
    %125 = arith.addf %121, %124 : vector<4x256xf32>
    %c20_59 = arith.constant 20 : index
    %c0_60 = arith.constant 0 : index
    %126 = vector.load %arg4[%c20_59, %c0_60] : memref<36x256xf32, #tpu.memory_space<vmem>>, vector<4x256xf32>
    %c255_i32_61 = arith.constant 255 : i32
    %127 = tpu.dynamic_rotate %101 by %c255_i32_61 dim 1 : vector<1x256xf32>, i32 -> vector<1x256xf32>
    %128 = vector.broadcast %127 : vector<1x256xf32> to vector<4x256xf32>
    %129 = arith.mulf %126, %128 : vector<4x256xf32>
    %130 = arith.addf %125, %129 : vector<4x256xf32>
    %c24_62 = arith.constant 24 : index
    %c0_63 = arith.constant 0 : index
    %131 = vector.load %arg4[%c24_62, %c0_63] : memref<36x256xf32, #tpu.memory_space<vmem>>, vector<4x256xf32>
    %c241_i32_64 = arith.constant 241 : i32
    %132 = tpu.dynamic_rotate %101 by %c241_i32_64 dim 1 : vector<1x256xf32>, i32 -> vector<1x256xf32>
    %133 = vector.broadcast %132 : vector<1x256xf32> to vector<4x256xf32>
    %134 = arith.mulf %131, %133 : vector<4x256xf32>
    %135 = arith.addf %130, %134 : vector<4x256xf32>
    %c28_65 = arith.constant 28 : index
    %c0_66 = arith.constant 0 : index
    %136 = vector.load %arg4[%c28_65, %c0_66] : memref<36x256xf32, #tpu.memory_space<vmem>>, vector<4x256xf32>
    %c240_i32_67 = arith.constant 240 : i32
    %137 = tpu.dynamic_rotate %101 by %c240_i32_67 dim 1 : vector<1x256xf32>, i32 -> vector<1x256xf32>
    %138 = vector.broadcast %137 : vector<1x256xf32> to vector<4x256xf32>
    %139 = arith.mulf %136, %138 : vector<4x256xf32>
    %140 = arith.addf %135, %139 : vector<4x256xf32>
    %c32_68 = arith.constant 32 : index
    %c0_69 = arith.constant 0 : index
    %141 = vector.load %arg4[%c32_68, %c0_69] : memref<36x256xf32, #tpu.memory_space<vmem>>, vector<4x256xf32>
    %c239_i32_70 = arith.constant 239 : i32
    %142 = tpu.dynamic_rotate %101 by %c239_i32_70 dim 1 : vector<1x256xf32>, i32 -> vector<1x256xf32>
    %143 = vector.broadcast %142 : vector<1x256xf32> to vector<4x256xf32>
    %144 = arith.mulf %141, %143 : vector<4x256xf32>
    %145 = arith.addf %140, %144 : vector<4x256xf32>
    %cst_71 = arith.constant dense<0xFF800000> : vector<256xf32>
    %146 = vector.multi_reduction <maximumf>, %145, %cst_71 [0] : vector<4x256xf32> to vector<256xf32>
    %147 = vector.shape_cast %146 : vector<256xf32> to vector<1x256xf32>
    %c0_72 = arith.constant 0 : index
    %c0_73 = arith.constant 0 : index
    %148 = vector.load %arg4[%c0_72, %c0_73] : memref<36x256xf32, #tpu.memory_space<vmem>>, vector<4x256xf32>
    %c17_i32_74 = arith.constant 17 : i32
    %149 = tpu.dynamic_rotate %147 by %c17_i32_74 dim 1 : vector<1x256xf32>, i32 -> vector<1x256xf32>
    %150 = vector.broadcast %149 : vector<1x256xf32> to vector<4x256xf32>
    %151 = arith.mulf %148, %150 : vector<4x256xf32>
    %152 = arith.addf %99, %151 : vector<4x256xf32>
    %c4_75 = arith.constant 4 : index
    %c0_76 = arith.constant 0 : index
    %153 = vector.load %arg4[%c4_75, %c0_76] : memref<36x256xf32, #tpu.memory_space<vmem>>, vector<4x256xf32>
    %c16_i32_77 = arith.constant 16 : i32
    %154 = tpu.dynamic_rotate %147 by %c16_i32_77 dim 1 : vector<1x256xf32>, i32 -> vector<1x256xf32>
    %155 = vector.broadcast %154 : vector<1x256xf32> to vector<4x256xf32>
    %156 = arith.mulf %153, %155 : vector<4x256xf32>
    %157 = arith.addf %152, %156 : vector<4x256xf32>
    %c8_78 = arith.constant 8 : index
    %c0_79 = arith.constant 0 : index
    %158 = vector.load %arg4[%c8_78, %c0_79] : memref<36x256xf32, #tpu.memory_space<vmem>>, vector<4x256xf32>
    %c15_i32_80 = arith.constant 15 : i32
    %159 = tpu.dynamic_rotate %147 by %c15_i32_80 dim 1 : vector<1x256xf32>, i32 -> vector<1x256xf32>
    %160 = vector.broadcast %159 : vector<1x256xf32> to vector<4x256xf32>
    %161 = arith.mulf %158, %160 : vector<4x256xf32>
    %162 = arith.addf %157, %161 : vector<4x256xf32>
    %c12_81 = arith.constant 12 : index
    %c0_82 = arith.constant 0 : index
    %163 = vector.load %arg4[%c12_81, %c0_82] : memref<36x256xf32, #tpu.memory_space<vmem>>, vector<4x256xf32>
    %c1_i32_83 = arith.constant 1 : i32
    %164 = tpu.dynamic_rotate %147 by %c1_i32_83 dim 1 : vector<1x256xf32>, i32 -> vector<1x256xf32>
    %165 = vector.broadcast %164 : vector<1x256xf32> to vector<4x256xf32>
    %166 = arith.mulf %163, %165 : vector<4x256xf32>
    %167 = arith.addf %162, %166 : vector<4x256xf32>
    %c16_84 = arith.constant 16 : index
    %c0_85 = arith.constant 0 : index
    %168 = vector.load %arg4[%c16_84, %c0_85] : memref<36x256xf32, #tpu.memory_space<vmem>>, vector<4x256xf32>
    %169 = vector.broadcast %147 : vector<1x256xf32> to vector<4x256xf32>
    %170 = arith.mulf %168, %169 : vector<4x256xf32>
    %171 = arith.addf %167, %170 : vector<4x256xf32>
    %c20_86 = arith.constant 20 : index
    %c0_87 = arith.constant 0 : index
    %172 = vector.load %arg4[%c20_86, %c0_87] : memref<36x256xf32, #tpu.memory_space<vmem>>, vector<4x256xf32>
    %c255_i32_88 = arith.constant 255 : i32
    %173 = tpu.dynamic_rotate %147 by %c255_i32_88 dim 1 : vector<1x256xf32>, i32 -> vector<1x256xf32>
    %174 = vector.broadcast %173 : vector<1x256xf32> to vector<4x256xf32>
    %175 = arith.mulf %172, %174 : vector<4x256xf32>
    %176 = arith.addf %171, %175 : vector<4x256xf32>
    %c24_89 = arith.constant 24 : index
    %c0_90 = arith.constant 0 : index
    %177 = vector.load %arg4[%c24_89, %c0_90] : memref<36x256xf32, #tpu.memory_space<vmem>>, vector<4x256xf32>
    %c241_i32_91 = arith.constant 241 : i32
    %178 = tpu.dynamic_rotate %147 by %c241_i32_91 dim 1 : vector<1x256xf32>, i32 -> vector<1x256xf32>
    %179 = vector.broadcast %178 : vector<1x256xf32> to vector<4x256xf32>
    %180 = arith.mulf %177, %179 : vector<4x256xf32>
    %181 = arith.addf %176, %180 : vector<4x256xf32>
    %c28_92 = arith.constant 28 : index
    %c0_93 = arith.constant 0 : index
    %182 = vector.load %arg4[%c28_92, %c0_93] : memref<36x256xf32, #tpu.memory_space<vmem>>, vector<4x256xf32>
    %c240_i32_94 = arith.constant 240 : i32
    %183 = tpu.dynamic_rotate %147 by %c240_i32_94 dim 1 : vector<1x256xf32>, i32 -> vector<1x256xf32>
    %184 = vector.broadcast %183 : vector<1x256xf32> to vector<4x256xf32>
    %185 = arith.mulf %182, %184 : vector<4x256xf32>
    %186 = arith.addf %181, %185 : vector<4x256xf32>
    %c32_95 = arith.constant 32 : index
    %c0_96 = arith.constant 0 : index
    %187 = vector.load %arg4[%c32_95, %c0_96] : memref<36x256xf32, #tpu.memory_space<vmem>>, vector<4x256xf32>
    %c239_i32_97 = arith.constant 239 : i32
    %188 = tpu.dynamic_rotate %147 by %c239_i32_97 dim 1 : vector<1x256xf32>, i32 -> vector<1x256xf32>
    %189 = vector.broadcast %188 : vector<1x256xf32> to vector<4x256xf32>
    %190 = arith.mulf %187, %189 : vector<4x256xf32>
    %191 = arith.addf %186, %190 : vector<4x256xf32>
    %cst_98 = arith.constant dense<0xFF800000> : vector<256xf32>
    %192 = vector.multi_reduction <maximumf>, %191, %cst_98 [0] : vector<4x256xf32> to vector<256xf32>
    %193 = vector.shape_cast %192 : vector<256xf32> to vector<1x256xf32>
    %c0_99 = arith.constant 0 : index
    %c0_100 = arith.constant 0 : index
    %194 = vector.load %arg4[%c0_99, %c0_100] : memref<36x256xf32, #tpu.memory_space<vmem>>, vector<4x256xf32>
    %c17_i32_101 = arith.constant 17 : i32
    %195 = tpu.dynamic_rotate %193 by %c17_i32_101 dim 1 : vector<1x256xf32>, i32 -> vector<1x256xf32>
    %196 = vector.broadcast %195 : vector<1x256xf32> to vector<4x256xf32>
    %197 = arith.mulf %194, %196 : vector<4x256xf32>
    %198 = arith.addf %99, %197 : vector<4x256xf32>
    %c4_102 = arith.constant 4 : index
    %c0_103 = arith.constant 0 : index
    %199 = vector.load %arg4[%c4_102, %c0_103] : memref<36x256xf32, #tpu.memory_space<vmem>>, vector<4x256xf32>
    %c16_i32_104 = arith.constant 16 : i32
    %200 = tpu.dynamic_rotate %193 by %c16_i32_104 dim 1 : vector<1x256xf32>, i32 -> vector<1x256xf32>
    %201 = vector.broadcast %200 : vector<1x256xf32> to vector<4x256xf32>
    %202 = arith.mulf %199, %201 : vector<4x256xf32>
    %203 = arith.addf %198, %202 : vector<4x256xf32>
    %c8_105 = arith.constant 8 : index
    %c0_106 = arith.constant 0 : index
    %204 = vector.load %arg4[%c8_105, %c0_106] : memref<36x256xf32, #tpu.memory_space<vmem>>, vector<4x256xf32>
    %c15_i32_107 = arith.constant 15 : i32
    %205 = tpu.dynamic_rotate %193 by %c15_i32_107 dim 1 : vector<1x256xf32>, i32 -> vector<1x256xf32>
    %206 = vector.broadcast %205 : vector<1x256xf32> to vector<4x256xf32>
    %207 = arith.mulf %204, %206 : vector<4x256xf32>
    %208 = arith.addf %203, %207 : vector<4x256xf32>
    %c12_108 = arith.constant 12 : index
    %c0_109 = arith.constant 0 : index
    %209 = vector.load %arg4[%c12_108, %c0_109] : memref<36x256xf32, #tpu.memory_space<vmem>>, vector<4x256xf32>
    %c1_i32_110 = arith.constant 1 : i32
    %210 = tpu.dynamic_rotate %193 by %c1_i32_110 dim 1 : vector<1x256xf32>, i32 -> vector<1x256xf32>
    %211 = vector.broadcast %210 : vector<1x256xf32> to vector<4x256xf32>
    %212 = arith.mulf %209, %211 : vector<4x256xf32>
    %213 = arith.addf %208, %212 : vector<4x256xf32>
    %c16_111 = arith.constant 16 : index
    %c0_112 = arith.constant 0 : index
    %214 = vector.load %arg4[%c16_111, %c0_112] : memref<36x256xf32, #tpu.memory_space<vmem>>, vector<4x256xf32>
    %215 = vector.broadcast %193 : vector<1x256xf32> to vector<4x256xf32>
    %216 = arith.mulf %214, %215 : vector<4x256xf32>
    %217 = arith.addf %213, %216 : vector<4x256xf32>
    %c20_113 = arith.constant 20 : index
    %c0_114 = arith.constant 0 : index
    %218 = vector.load %arg4[%c20_113, %c0_114] : memref<36x256xf32, #tpu.memory_space<vmem>>, vector<4x256xf32>
    %c255_i32_115 = arith.constant 255 : i32
    %219 = tpu.dynamic_rotate %193 by %c255_i32_115 dim 1 : vector<1x256xf32>, i32 -> vector<1x256xf32>
    %220 = vector.broadcast %219 : vector<1x256xf32> to vector<4x256xf32>
    %221 = arith.mulf %218, %220 : vector<4x256xf32>
    %222 = arith.addf %217, %221 : vector<4x256xf32>
    %c24_116 = arith.constant 24 : index
    %c0_117 = arith.constant 0 : index
    %223 = vector.load %arg4[%c24_116, %c0_117] : memref<36x256xf32, #tpu.memory_space<vmem>>, vector<4x256xf32>
    %c241_i32_118 = arith.constant 241 : i32
    %224 = tpu.dynamic_rotate %193 by %c241_i32_118 dim 1 : vector<1x256xf32>, i32 -> vector<1x256xf32>
    %225 = vector.broadcast %224 : vector<1x256xf32> to vector<4x256xf32>
    %226 = arith.mulf %223, %225 : vector<4x256xf32>
    %227 = arith.addf %222, %226 : vector<4x256xf32>
    %c28_119 = arith.constant 28 : index
    %c0_120 = arith.constant 0 : index
    %228 = vector.load %arg4[%c28_119, %c0_120] : memref<36x256xf32, #tpu.memory_space<vmem>>, vector<4x256xf32>
    %c240_i32_121 = arith.constant 240 : i32
    %229 = tpu.dynamic_rotate %193 by %c240_i32_121 dim 1 : vector<1x256xf32>, i32 -> vector<1x256xf32>
    %230 = vector.broadcast %229 : vector<1x256xf32> to vector<4x256xf32>
    %231 = arith.mulf %228, %230 : vector<4x256xf32>
    %232 = arith.addf %227, %231 : vector<4x256xf32>
    %c32_122 = arith.constant 32 : index
    %c0_123 = arith.constant 0 : index
    %233 = vector.load %arg4[%c32_122, %c0_123] : memref<36x256xf32, #tpu.memory_space<vmem>>, vector<4x256xf32>
    %c239_i32_124 = arith.constant 239 : i32
    %234 = tpu.dynamic_rotate %193 by %c239_i32_124 dim 1 : vector<1x256xf32>, i32 -> vector<1x256xf32>
    %235 = vector.broadcast %234 : vector<1x256xf32> to vector<4x256xf32>
    %236 = arith.mulf %233, %235 : vector<4x256xf32>
    %237 = arith.addf %232, %236 : vector<4x256xf32>
    %cst_125 = arith.constant dense<0xFF800000> : vector<256xf32>
    %238 = vector.multi_reduction <maximumf>, %237, %cst_125 [0] : vector<4x256xf32> to vector<256xf32>
    %239 = vector.shape_cast %238 : vector<256xf32> to vector<1x256xf32>
    %c0_126 = arith.constant 0 : index
    %c0_127 = arith.constant 0 : index
    %240 = vector.load %arg4[%c0_126, %c0_127] : memref<36x256xf32, #tpu.memory_space<vmem>>, vector<4x256xf32>
    %c17_i32_128 = arith.constant 17 : i32
    %241 = tpu.dynamic_rotate %239 by %c17_i32_128 dim 1 : vector<1x256xf32>, i32 -> vector<1x256xf32>
    %242 = vector.broadcast %241 : vector<1x256xf32> to vector<4x256xf32>
    %243 = arith.mulf %240, %242 : vector<4x256xf32>
    %244 = arith.addf %99, %243 : vector<4x256xf32>
    %c4_129 = arith.constant 4 : index
    %c0_130 = arith.constant 0 : index
    %245 = vector.load %arg4[%c4_129, %c0_130] : memref<36x256xf32, #tpu.memory_space<vmem>>, vector<4x256xf32>
    %c16_i32_131 = arith.constant 16 : i32
    %246 = tpu.dynamic_rotate %239 by %c16_i32_131 dim 1 : vector<1x256xf32>, i32 -> vector<1x256xf32>
    %247 = vector.broadcast %246 : vector<1x256xf32> to vector<4x256xf32>
    %248 = arith.mulf %245, %247 : vector<4x256xf32>
    %249 = arith.addf %244, %248 : vector<4x256xf32>
    %c8_132 = arith.constant 8 : index
    %c0_133 = arith.constant 0 : index
    %250 = vector.load %arg4[%c8_132, %c0_133] : memref<36x256xf32, #tpu.memory_space<vmem>>, vector<4x256xf32>
    %c15_i32_134 = arith.constant 15 : i32
    %251 = tpu.dynamic_rotate %239 by %c15_i32_134 dim 1 : vector<1x256xf32>, i32 -> vector<1x256xf32>
    %252 = vector.broadcast %251 : vector<1x256xf32> to vector<4x256xf32>
    %253 = arith.mulf %250, %252 : vector<4x256xf32>
    %254 = arith.addf %249, %253 : vector<4x256xf32>
    %c12_135 = arith.constant 12 : index
    %c0_136 = arith.constant 0 : index
    %255 = vector.load %arg4[%c12_135, %c0_136] : memref<36x256xf32, #tpu.memory_space<vmem>>, vector<4x256xf32>
    %c1_i32_137 = arith.constant 1 : i32
    %256 = tpu.dynamic_rotate %239 by %c1_i32_137 dim 1 : vector<1x256xf32>, i32 -> vector<1x256xf32>
    %257 = vector.broadcast %256 : vector<1x256xf32> to vector<4x256xf32>
    %258 = arith.mulf %255, %257 : vector<4x256xf32>
    %259 = arith.addf %254, %258 : vector<4x256xf32>
    %c16_138 = arith.constant 16 : index
    %c0_139 = arith.constant 0 : index
    %260 = vector.load %arg4[%c16_138, %c0_139] : memref<36x256xf32, #tpu.memory_space<vmem>>, vector<4x256xf32>
    %261 = vector.broadcast %239 : vector<1x256xf32> to vector<4x256xf32>
    %262 = arith.mulf %260, %261 : vector<4x256xf32>
    %263 = arith.addf %259, %262 : vector<4x256xf32>
    %c20_140 = arith.constant 20 : index
    %c0_141 = arith.constant 0 : index
    %264 = vector.load %arg4[%c20_140, %c0_141] : memref<36x256xf32, #tpu.memory_space<vmem>>, vector<4x256xf32>
    %c255_i32_142 = arith.constant 255 : i32
    %265 = tpu.dynamic_rotate %239 by %c255_i32_142 dim 1 : vector<1x256xf32>, i32 -> vector<1x256xf32>
    %266 = vector.broadcast %265 : vector<1x256xf32> to vector<4x256xf32>
    %267 = arith.mulf %264, %266 : vector<4x256xf32>
    %268 = arith.addf %263, %267 : vector<4x256xf32>
    %c24_143 = arith.constant 24 : index
    %c0_144 = arith.constant 0 : index
    %269 = vector.load %arg4[%c24_143, %c0_144] : memref<36x256xf32, #tpu.memory_space<vmem>>, vector<4x256xf32>
    %c241_i32_145 = arith.constant 241 : i32
    %270 = tpu.dynamic_rotate %239 by %c241_i32_145 dim 1 : vector<1x256xf32>, i32 -> vector<1x256xf32>
    %271 = vector.broadcast %270 : vector<1x256xf32> to vector<4x256xf32>
    %272 = arith.mulf %269, %271 : vector<4x256xf32>
    %273 = arith.addf %268, %272 : vector<4x256xf32>
    %c28_146 = arith.constant 28 : index
    %c0_147 = arith.constant 0 : index
    %274 = vector.load %arg4[%c28_146, %c0_147] : memref<36x256xf32, #tpu.memory_space<vmem>>, vector<4x256xf32>
    %c240_i32_148 = arith.constant 240 : i32
    %275 = tpu.dynamic_rotate %239 by %c240_i32_148 dim 1 : vector<1x256xf32>, i32 -> vector<1x256xf32>
    %276 = vector.broadcast %275 : vector<1x256xf32> to vector<4x256xf32>
    %277 = arith.mulf %274, %276 : vector<4x256xf32>
    %278 = arith.addf %273, %277 : vector<4x256xf32>
    %c32_149 = arith.constant 32 : index
    %c0_150 = arith.constant 0 : index
    %279 = vector.load %arg4[%c32_149, %c0_150] : memref<36x256xf32, #tpu.memory_space<vmem>>, vector<4x256xf32>
    %c239_i32_151 = arith.constant 239 : i32
    %280 = tpu.dynamic_rotate %239 by %c239_i32_151 dim 1 : vector<1x256xf32>, i32 -> vector<1x256xf32>
    %281 = vector.broadcast %280 : vector<1x256xf32> to vector<4x256xf32>
    %282 = arith.mulf %279, %281 : vector<4x256xf32>
    %283 = arith.addf %278, %282 : vector<4x256xf32>
    %cst_152 = arith.constant dense<0xFF800000> : vector<256xf32>
    %284 = vector.multi_reduction <maximumf>, %283, %cst_152 [0] : vector<4x256xf32> to vector<256xf32>
    %285 = vector.shape_cast %284 : vector<256xf32> to vector<1x256xf32>
    %c0_153 = arith.constant 0 : index
    %c0_154 = arith.constant 0 : index
    %286 = vector.load %arg6[%c0_153, %c0_154] : memref<1x256xf32, #tpu.memory_space<vmem>>, vector<1x256xf32>
    tpu.vector_store %arg6[%c0_153, %c0_154], %285 {strides = array<i32>} : memref<1x256xf32, #tpu.memory_space<vmem>>, vector<1x256xf32>,
    return
  }
  func.func @transform_0(%arg0: i32) -> (i32, i32) {
    %c0_i32 = arith.constant 0 : i32
    %c0_i32_0 = arith.constant 0 : i32
    return %c0_i32, %arg0 : i32, i32
  }
  func.func @transform_1(%arg0: i32) -> (i32, i32) {
    %c0_i32 = arith.constant 0 : i32
    %c0_i32_0 = arith.constant 0 : i32
    %c0_i32_1 = arith.constant 0 : i32
    return %c0_i32, %c0_i32_0 : i32, i32
  }
  func.func @transform_2(%arg0: i32) -> (i32, i32) {
    %c0_i32 = arith.constant 0 : i32
    %c0_i32_0 = arith.constant 0 : i32
    %c0_i32_1 = arith.constant 0 : i32
    return %c0_i32, %c0_i32_0 : i32, i32
  }
  func.func @transform_3(%arg0: i32) -> (i32, i32) {
    %c0_i32 = arith.constant 0 : i32
    %c0_i32_0 = arith.constant 0 : i32
    %c0_i32_1 = arith.constant 0 : i32
    return %c0_i32, %c0_i32_0 : i32, i32
  }
  func.func @transform_4(%arg0: i32) -> (i32, i32) {
    %c0_i32 = arith.constant 0 : i32
    %c0_i32_0 = arith.constant 0 : i32
    %c0_i32_1 = arith.constant 0 : i32
    return %c0_i32, %c0_i32_0 : i32, i32
  }
  func.func @transform_5(%arg0: i32) -> (i32, i32) {
    %c0_i32 = arith.constant 0 : i32
    %c0_i32_0 = arith.constant 0 : i32
    return %c0_i32, %arg0 : i32, i32
  }
}

</mosaic_0001>

<llo_original>
// kernel: tpu_custom_call.1
$region0: #{tpu_custom_call.1}
  #allocation0 [shape = 'u32[]', space=smem, size = 0x4, offset = 0x4, fixed_abs, tag = 'smem constant byte address 0x4 - core index']
  #allocation1 [shape = 'u32[144,128]{1,0:T(1,128)}', space=vmem, size = 0x12000, scoped, tag = 'internal scratch']
  %s0 = inlined_call_operand.hbm [shape: f32[2,512], index: 0, kind: input, shape index: {}]
  %s1 = inlined_call_operand.hbm [shape: f32[18,256], index: 1, kind: input, shape index: {}]
  %s2 = inlined_call_operand.hbm [shape: f32[36,256], index: 2, kind: input, shape index: {}]
  %s3 = inlined_call_operand.hbm [shape: f32[36,256], index: 3, kind: input, shape index: {}]
  %s4 = inlined_call_operand.vmem [shape: f32[4,256], index: 4, kind: input, shape index: {}]
  %s5 = inlined_call_operand.hbm [shape: f32[1,512], index: 5, kind: output, shape index: {}]
  %s6 = sld [smem:[#allocation0]]
  $region69: #{tpu_custom_call.1} parent=0
    _
  %s8 = ssub.s32 1, %s6
  %s9 = scalar_select 0, %s8, %s6
  $region1: #{tpu_custom_call.1} parent=0
    #allocation2 [shape = 'u8[4096]{0}', space=vmem, size = 0x1000, scoped, tag = 'input window, operand 0']
    #allocation3 [shape = 's32[2]{0}', space=sflag, size = 0x8, scoped, tag = 'scoped memory for tpu_custom_call.1']
    #allocation4 [shape = 's32[2]{0}', space=sflag, size = 0x8, scoped, tag = 'scoped memory for tpu_custom_call.1']
    #allocation5 [shape = 'u8[24576]{0}', space=vmem, size = 0x6000, scoped, tag = 'input window, operand 1, single buffered']
    #allocation6 [shape = 's32[1]{0}', space=sflag, size = 0x4, scoped, tag = 'scoped memory for tpu_custom_call.1']
    #allocation7 [shape = 'u8[40960]{0}', space=vmem, size = 0xa000, scoped, tag = 'input window, operand 2, single buffered']
    #allocation8 [shape = 'u8[40960]{0}', space=vmem, size = 0xa000, scoped, tag = 'input window, operand 3, single buffered']
    #allocation9 [shape = 's32[1]{0}', space=sflag, size = 0x4, scoped, tag = 'scoped memory for tpu_custom_call.1']
    #allocation10 [shape = 'u8[2048]{0}', space=vmem, size = 0x800, scoped, tag = 'output window, operand 0']
    %10 = vsyncpa [#allocation3], 0
    %s11 = scalar_lea.sflag [#allocation3], 1
    %12 = vsyncpa %s11, 0
    %13 = vsyncpa [#allocation6], 0
    %14 = vsyncpa [#allocation9], 0
    %15 = vsyncpa [#allocation4], 0
    %s16 = scalar_lea.sflag [#allocation4], 1
    %17 = vsyncpa %s16, 0
    loop: start=0, step=1, limit=4
    $region2: #{tpu_custom_call.1} parent=1 // loop_pre_header
      _
    $region3: #{tpu_custom_call.1} parent=1 // loop_header
      %s19 = sphi 0, %s23
      %p20 = scmp.ge.s32.totalorder %s19, 4
      %s29 = sphi 0, %s31
      %s32 = sphi 0, %s29
      %s33 = sphi 0, %s32
      %s49 = sphi 0, %s33
      %s53 = sphi 0, %s53
      %s55 = sphi 0, %s53
      %s56 = sphi 0, %s55
      %s70 = sphi 0, %s56
      %s74 = sphi 0, %s74
      %s76 = sphi 0, %s74
      %s77 = sphi 0, %s76
      %s91 = sphi 0, %s77
      %s95 = sphi 0, %s95
      %s97 = sphi 0, %s95
      %s98 = sphi 0, %s97
      %s112 = sphi 0, %s98
      %s116 = sphi 0, %s116
      %s118 = sphi 0, %s116
      %s119 = sphi 0, %s118
      %s133 = sphi 0, %s119
      %s139 = sphi 0, %s141
      %s142 = sphi 0, %s139
      %s143 = sphi 0, %s142
      %s159 = sphi 0, %s143
    $region4: #{tpu_custom_call.1} parent=1 // loop_header_branch
      %22 = sbr.rel (%p20) target = $region8
    $region5: #{tpu_custom_call.1} parent=1 // loop_body
      %s24 = ssub.s32 %s19, 1
      %s25 = ssub.s32 %s19, 2
      %s26 = sadd.s32 %s19, 1
      %s27 = ssub.s32 %s19, %s26
      %p28 = scmp.eq.s32.totalorder %s27, 0
      %s30 = sadd.s32 %s29, 1
      %s31 = scalar_select %p28, %s29, %s30
      %p34 = pneg %p28
      %p35 = scmp.eq.s32.totalorder %s19, 1
      %p36 = por %p34, %p35
      %p37 = scmp.ne.s32.totalorder %s29, %s32
      %p38 = scmp.eq.s32.totalorder %s19, 0
      %p39 = por %p37, %p38
      %p40 = scmp.ne.s32.totalorder %s29, %s32
      %p41 = scmp.eq.s32.totalorder %s24, 1
      %p42 = por %p40, %p41
      %p43 = scmp.ne.s32.totalorder %s32, %s33
      %p44 = scmp.eq.s32.totalorder %s24, 0
      %p45 = por %p43, %p44
      %p46 = scmp.ne.s32.totalorder %s32, %s33
      %p47 = scmp.eq.s32.totalorder %s25, 1
      %p48 = por %p46, %p47
      %p50 = scmp.ne.s32.totalorder %s33, %s49
      %p51 = scmp.eq.s32.totalorder %s25, 0
      %p52 = por %p50, %p51
      %s54 = sadd.s32 %s53, 1
      %p57 = scmp.eq.s32.totalorder %s19, 1
      %p58 = scmp.ne.s32.totalorder %s53, %s55
      %p59 = scmp.eq.s32.totalorder %s19, 0
      %p60 = por %p58, %p59
      %p61 = scmp.ne.s32.totalorder %s53, %s55
      %p62 = scmp.eq.s32.totalorder %s24, 1
      %p63 = por %p61, %p62
      %p64 = scmp.ne.s32.totalorder %s55, %s56
      %p65 = scmp.eq.s32.totalorder %s24, 0
      %p66 = por %p64, %p65
      %p67 = scmp.ne.s32.totalorder %s55, %s56
      %p68 = scmp.eq.s32.totalorder %s25, 1
      %p69 = por %p67, %p68
      %p71 = scmp.ne.s32.totalorder %s56, %s70
      %p72 = scmp.eq.s32.totalorder %s25, 0
      %p73 = por %p71, %p72
      %s75 = sadd.s32 %s74, 1
      %p78 = scmp.eq.s32.totalorder %s19, 1
      %p79 = scmp.ne.s32.totalorder %s74, %s76
      %p80 = scmp.eq.s32.totalorder %s19, 0
      %p81 = por %p79, %p80
      %p82 = scmp.ne.s32.totalorder %s74, %s76
      %p83 = scmp.eq.s32.totalorder %s24, 1
      %p84 = por %p82, %p83
      %p85 = scmp.ne.s32.totalorder %s76, %s77
      %p86 = scmp.eq.s32.totalorder %s24, 0
      %p87 = por %p85, %p86
      %p88 = scmp.ne.s32.totalorder %s76, %s77
      %p89 = scmp.eq.s32.totalorder %s25, 1
      %p90 = por %p88, %p89
      %p92 = scmp.ne.s32.totalorder %s77, %s91
      %p93 = scmp.eq.s32.totalorder %s25, 0
      %p94 = por %p92, %p93
      %s96 = sadd.s32 %s95, 1
      %p99 = scmp.eq.s32.totalorder %s19, 1
      %p100 = scmp.ne.s32.totalorder %s95, %s97
      %p101 = scmp.eq.s32.totalorder %s19, 0
      %p102 = por %p100, %p101
      %p103 = scmp.ne.s32.totalorder %s95, %s97
      %p104 = scmp.eq.s32.totalorder %s24, 1
      %p105 = por %p103, %p104
      %p106 = scmp.ne.s32.totalorder %s97, %s98
      %p107 = scmp.eq.s32.totalorder %s24, 0
      %p108 = por %p106, %p107
      %p109 = scmp.ne.s32.totalorder %s97, %s98
      %p110 = scmp.eq.s32.totalorder %s25, 1
      %p111 = por %p109, %p110
      %p113 = scmp.ne.s32.totalorder %s98, %s112
      %p114 = scmp.eq.s32.totalorder %s25, 0
      %p115 = por %p113, %p114
      %s117 = sadd.s32 %s116, 1
      %p120 = scmp.eq.s32.totalorder %s19, 1
      %p121 = scmp.ne.s32.totalorder %s116, %s118
      %p122 = scmp.eq.s32.totalorder %s19, 0
      %p123 = por %p121, %p122
      %p124 = scmp.ne.s32.totalorder %s116, %s118
      %p125 = scmp.eq.s32.totalorder %s24, 1
      %p126 = por %p124, %p125
      %p127 = scmp.ne.s32.totalorder %s118, %s119
      %p128 = scmp.eq.s32.totalorder %s24, 0
      %p129 = por %p127, %p128
      %p130 = scmp.ne.s32.totalorder %s118, %s119
      %p131 = scmp.eq.s32.totalorder %s25, 1
      %p132 = por %p130, %p131
      %p134 = scmp.ne.s32.totalorder %s119, %s133
      %p135 = scmp.eq.s32.totalorder %s25, 0
      %p136 = por %p134, %p135
      %s137 = ssub.s32 %s19, %s26
      %p138 = scmp.eq.s32.totalorder %s137, 0
      %s140 = sadd.s32 %s139, 1
      %s141 = scalar_select %p138, %s139, %s140
      %p144 = pneg %p138
      %p145 = scmp.eq.s32.totalorder %s19, 1
      %p146 = por %p144, %p145
      %p147 = scmp.ne.s32.totalorder %s139, %s142
      %p148 = scmp.eq.s32.totalorder %s19, 0
      %p149 = por %p147, %p148
      %p150 = scmp.ne.s32.totalorder %s139, %s142
      %p151 = scmp.eq.s32.totalorder %s24, 1
      %p152 = por %p150, %p151
      %p153 = scmp.ne.s32.totalorder %s142, %s143
      %p154 = scmp.eq.s32.totalorder %s24, 0
      %p155 = por %p153, %p154
      %p156 = scmp.ne.s32.totalorder %s142, %s143
      %p157 = scmp.eq.s32.totalorder %s25, 1
      %p158 = por %p156, %p157
      %p160 = scmp.ne.s32.totalorder %s143, %s159
      %p161 = scmp.eq.s32.totalorder %s25, 0
      %p162 = por %p160, %p161
      %p163 = scmp.le.s32.totalorder 1, %s19
      %p164 = scmp.lt.s32.totalorder %s19, 3
      %p165 = pnand %p163, %p164
      %p166 = pneg %p165
      // Predicated region
      $region9: #{tpu_custom_call.1} parent=5 // pred_check
        _
      $region10: #{tpu_custom_call.1} parent=5 // pred_check_branch
        %168 = sbr.rel (%p165) target = $region12
      $region11: #{tpu_custom_call.1} parent=5 // pred_region
        %s169 = ssub.s32 %s19, 1
        // Predicated region
        $region13: #{tpu_custom_call.1} parent=11 // pred_check
          %p170 = pneg %p66
        $region14: #{tpu_custom_call.1} parent=11 // pred_check_branch
          %172 = sbr.rel (%p170) target = $region16
        $region15: #{tpu_custom_call.1} parent=11 // pred_region
          %s174 = ssub.s32 768, 768
          %175 = vsyncadd [#allocation6], %s174
          %s176 = sshll.u32 [#allocation5], 4
          %s177 = int_to_ptr.vmem [resolvable:$true] %s176
          %182 = dma.hbm_to_vmem [thread:$0]  %s1, 768, %s177, [#allocation6], 256, 256, 16
        $region16: #{tpu_custom_call.1} parent=11 // pred_fallthru
          _
        // Predicated region
        $region17: #{tpu_custom_call.1} parent=11 // pred_check
          %p183 = pneg %p87
        $region18: #{tpu_custom_call.1} parent=11 // pred_check_branch
          %185 = sbr.rel (%p183) target = $region20
        $region19: #{tpu_custom_call.1} parent=11 // pred_region
          %s187 = ssub.s32 1280, 1280
          %188 = vsyncadd [#allocation6], %s187
          %s189 = sshll.u32 [#allocation7], 4
          %s190 = int_to_ptr.vmem [resolvable:$true] %s189
          %195 = dma.hbm_to_vmem [thread:$0]  %s2, 1280, %s190, [#allocation6], 256, 256, 16
        $region20: #{tpu_custom_call.1} parent=11 // pred_fallthru
          _
        // Predicated region
        $region21: #{tpu_custom_call.1} parent=11 // pred_check
          %p196 = pneg %p108
        $region22: #{tpu_custom_call.1} parent=11 // pred_check_branch
          %198 = sbr.rel (%p196) target = $region24
        $region23: #{tpu_custom_call.1} parent=11 // pred_region
          %s200 = ssub.s32 1280, 1280
          %201 = vsyncadd [#allocation9], %s200
          %s202 = sshll.u32 [#allocation8], 4
          %s203 = int_to_ptr.vmem [resolvable:$true] %s202
          %208 = dma.hbm_to_vmem [thread:$0]  %s3, 1280, %s203, [#allocation9], 256, 256, 16
        $region24: #{tpu_custom_call.1} parent=11 // pred_fallthru
          _
        // Predicated region
        $region25: #{tpu_custom_call.1} parent=11 // pred_check
          %p209 = pneg %p129
        $region26: #{tpu_custom_call.1} parent=11 // pred_check_branch
          %211 = sbr.rel (%p209) target = $region28
        $region27: #{tpu_custom_call.1} parent=11 // pred_region
          _
        $region28: #{tpu_custom_call.1} parent=11 // pred_fallthru
          _
      $region12: #{tpu_custom_call.1} parent=5 // pred_fallthru
        _
      %p212 = scmp.lt.s32.totalorder %s19, 2
      // Predicated region
      $region29: #{tpu_custom_call.1} parent=5 // pred_check
        %p213 = pneg %p212
      $region30: #{tpu_custom_call.1} parent=5 // pred_check_branch
        %215 = sbr.rel (%p213) target = $region32
      $region31: #{tpu_custom_call.1} parent=5 // pred_region
        // Predicated region
        $region33: #{tpu_custom_call.1} parent=31 // pred_check
          %p216 = pneg %p39
        $region34: #{tpu_custom_call.1} parent=31 // pred_check_branch
          %218 = sbr.rel (%p216) target = $region36
        $region35: #{tpu_custom_call.1} parent=31 // pred_region
          %s219 = sand.u32 %s29, 1
          %s220 = scalar_lea.sflag [#allocation3], %s219
          %s221 = sand.u32 %s29, 1
          %s222 = smul.addr %s221, 4
          %s223 = scalar_lea.vmem [#allocation2], %s222
          %s224 = smul.u32 2, %s19
          %s226 = ssub.s32 64, 64
          %227 = vsyncadd %s220, %s226
          %s228 = smul.addr %s224, 32
          %s229 = scalar_lea.hbm %s0, %s228
          %s231 = sshll.u32 %s223, 4
          %s232 = int_to_ptr.vmem [resolvable:$true] %s231
          %234 = dma.hbm_to_vmem [thread:$0]  %s229, 64, %s232, %s220
        $region36: #{tpu_custom_call.1} parent=31 // pred_fallthru
          _
      $region32: #{tpu_custom_call.1} parent=5 // pred_fallthru
        _
      %p235 = scmp.le.s32.totalorder 1, %s19
      %p236 = scmp.lt.s32.totalorder %s19, 3
      %p237 = pnand %p235, %p236
      %p238 = pneg %p237
      // Predicated region
      $region37: #{tpu_custom_call.1} parent=5 // pred_check
        _
      $region38: #{tpu_custom_call.1} parent=5 // pred_check_branch
        %240 = sbr.rel (%p237) target = $region40
      $region39: #{tpu_custom_call.1} parent=5 // pred_region
        %s241 = ssub.s32 %s19, 1
        %s242 = sand.u32 %s32, 1
        %s243 = scalar_lea.sflag [#allocation3], %s242
        %s244 = sand.u32 %s32, 1
        %s245 = smul.addr %s244, 4
        %s246 = scalar_lea.vmem [#allocation2], %s245
        // Predicated region
        $region41: #{tpu_custom_call.1} parent=39 // pred_check
          %p247 = pneg %p45
        $region42: #{tpu_custom_call.1} parent=39 // pred_check_branch
          %249 = sbr.rel (%p247) target = $region44
        $region43: #{tpu_custom_call.1} parent=39 // pred_region
          %250 = dma.done %s243, 64
        $region44: #{tpu_custom_call.1} parent=39 // pred_fallthru
          _
        // Predicated region
        $region45: #{tpu_custom_call.1} parent=39 // pred_check
          %p251 = pneg %p66
        $region46: #{tpu_custom_call.1} parent=39 // pred_check_branch
          %253 = sbr.rel (%p251) target = $region48
        $region47: #{tpu_custom_call.1} parent=39 // pred_region
          %254 = dma.done [#allocation6], 768
        $region48: #{tpu_custom_call.1} parent=39 // pred_fallthru
          _
        // Predicated region
        $region49: #{tpu_custom_call.1} parent=39 // pred_check
          %p255 = pneg %p87
        $region50: #{tpu_custom_call.1} parent=39 // pred_check_branch
          %257 = sbr.rel (%p255) target = $region52
        $region51: #{tpu_custom_call.1} parent=39 // pred_region
          %258 = dma.done [#allocation6], 1280
        $region52: #{tpu_custom_call.1} parent=39 // pred_fallthru
          _
        // Predicated region
        $region53: #{tpu_custom_call.1} parent=39 // pred_check
          %p259 = pneg %p108
        $region54: #{tpu_custom_call.1} parent=39 // pred_check_branch
          %261 = sbr.rel (%p259) target = $region56
        $region55: #{tpu_custom_call.1} parent=39 // pred_region
          %262 = dma.done [#allocation9], 1280
        $region56: #{tpu_custom_call.1} parent=39 // pred_fallthru
          _
        %s263 = sand.u32 %s32, 1
        %s264 = scalar_lea.sflag [#allocation3], %s263
        %s265 = sand.u32 %s32, 1
        %s266 = smul.addr %s265, 4
        %s267 = scalar_lea.vmem [#allocation2], %s266
        %p268 = pneg %p45
        %p269 = pneg %p42
        %p270 = pneg %p66
        %p271 = pneg %p63
        %p272 = pneg %p87
        %p273 = pneg %p84
        %p274 = pneg %p108
        %p275 = pneg %p105
        %p276 = pneg %p129
        %p277 = pneg %p126
        %p278 = pneg %p155
        %p279 = pneg %p152
        %s280 = sand.u32 %s142, 1
        %s281 = scalar_lea.sflag [#allocation4], %s280
        %s282 = sand.u32 %s142, 1
        %s283 = smul.addr %s282, 2
        %s284 = scalar_lea.vmem [#allocation10], %s283
        %s285 = smul.u32 2, %s24
        %s286 = smul.u32 2, %s24
        %v287 = vld [vmem:[%s246] sm:$0xf]
        %v288 = vld [vmem:[#allocation5] sm:$0x3]
        %v289 = vld [vmem:[#allocation5 + $0x8] sm:$0x3]
        %v292 = vunpack.c.l.s4 1983009808
        %v293 = vunpack.c.0.s8 %v292
        %v294 = vlaneseq
        %v295 = vshrl.u32 %v294, 7
        %v296 = vsub.s32 %v293, %v295
        %v297 = vrot.slane %v287, %v296
        %v298 = vcombine.high %v297, %v297
        %301 = vrot.lane.b32.xlu0 %v297, 17
        %v302 = vpop.permute.xlu0 %301
        %303 = vrot.lane.b32.xlu0 %v298, 17
        %v304 = vpop.permute.xlu0 %303
        %v305 = vlaneseq
        %v306 = vand.u32 %v305, 127
        %vm307 = vcmp.lt.s32.totalorder %v306, 17
        %v308 = vsel %vm307, %v302, %v304
        %v309 = vsel %vm307, %v304, %v302
        %v310 = vmul.f32 %v288, %v309
        %v311 = vmul.f32 %v289, %v308
        %vm312 = vcmask 1041408
        %v313 = vsel %vm312, %v310, 0.0
        %v314 = vrot.slane %v313, 4
        %v315 = vadd.f32 %v313, %v314
        %v316 = vrot.slane %v315, 2
        %v317 = vadd.f32 %v315, %v316
        %v318 = vrot.slane %v317, 1
        %v319 = vadd.f32 %v317, %v318
        %v320 = vsel %vm312, %v311, 0.0
        %v321 = vrot.slane %v320, 4
        %v322 = vadd.f32 %v320, %v321
        %v323 = vrot.slane %v322, 2
        %v324 = vadd.f32 %v322, %v323
        %v325 = vrot.slane %v324, 1
        %v326 = vadd.f32 %v324, %v325
        %v327 = vadd.f32 %v319, 0.0
        %v328 = vadd.f32 %v326, 0.0
        %v329 = vld [vmem:[#allocation5] sm:$0xc]
        %v330 = vld [vmem:[#allocation5 + $0x8] sm:$0xc]
        %331 = vrot.lane.b32.xlu0 %v297, 16
        %v332 = vpop.permute.xlu0 %331
        %333 = vrot.lane.b32.xlu0 %v298, 16
        %v334 = vpop.permute.xlu0 %333
        %vm335 = vcmp.lt.s32.totalorder %v306, 16
        %v336 = vsel %vm335, %v332, %v334
        %v337 = vsel %vm335, %v334, %v332
        %v340 = vrot.slane %v337, 6
        %v341 = vrot.slane %v336, 6
        %v344 = vmul.f32 %v329, %v340
        %v345 = vmul.f32 %v330, %v341
        %v348 = vrot.slane %v344, 2
        %v349 = vrot.slane %v345, 2
        %v352 = vsel %vm312, %v348, 0.0
        %v353 = vrot.slane %v352, 4
        %v354 = vadd.f32 %v352, %v353
        %v355 = vrot.slane %v354, 2
        %v356 = vadd.f32 %v354, %v355
        %v357 = vrot.slane %v356, 1
        %v358 = vadd.f32 %v356, %v357
        %v359 = vsel %vm312, %v349, 0.0
        %v360 = vrot.slane %v359, 4
        %v361 = vadd.f32 %v359, %v360
        %v362 = vrot.slane %v361, 2
        %v363 = vadd.f32 %v361, %v362
        %v364 = vrot.slane %v363, 1
        %v365 = vadd.f32 %v363, %v364
        %v366 = vadd.f32 %v327, %v358
        %v367 = vadd.f32 %v328, %v365
        %v368 = vld [vmem:[#allocation5] sm:$0x30]
        %v369 = vld [vmem:[#allocation5 + $0x8] sm:$0x30]
        %370 = vrot.lane.b32.xlu0 %v297, 15
        %v371 = vpop.permute.xlu0 %370
        %372 = vrot.lane.b32.xlu0 %v298, 15
        %v373 = vpop.permute.xlu0 %372
        %vm374 = vcmp.lt.s32.totalorder %v306, 15
        %v375 = vsel %vm374, %v371, %v373
        %v376 = vsel %vm374, %v373, %v371
        %v379 = vrot.slane %v376, 4
        %v380 = vrot.slane %v375, 4
        %v383 = vmul.f32 %v368, %v379
        %v384 = vmul.f32 %v369, %v380
        %v387 = vrot.slane %v383, 4
        %v388 = vrot.slane %v384, 4
        %v391 = vsel %vm312, %v387, 0.0
        %v392 = vrot.slane %v391, 4
        %v393 = vadd.f32 %v391, %v392
        %v394 = vrot.slane %v393, 2
        %v395 = vadd.f32 %v393, %v394
        %v396 = vrot.slane %v395, 1
        %v397 = vadd.f32 %v395, %v396
        %v398 = vsel %vm312, %v388, 0.0
        %v399 = vrot.slane %v398, 4
        %v400 = vadd.f32 %v398, %v399
        %v401 = vrot.slane %v400, 2
        %v402 = vadd.f32 %v400, %v401
        %v403 = vrot.slane %v402, 1
        %v404 = vadd.f32 %v402, %v403
        %v405 = vadd.f32 %v366, %v397
        %v406 = vadd.f32 %v367, %v404
        %v407 = vld [vmem:[#allocation5] sm:$0xc0]
        %v408 = vld [vmem:[#allocation5 + $0x8] sm:$0xc0]
        %409 = vrot.lane.b32.xlu0 %v297, 1
        %v410 = vpop.permute.xlu0 %409
        %411 = vrot.lane.b32.xlu0 %v298, 1
        %v412 = vpop.permute.xlu0 %411
        %vm413 = vcmp.lt.s32.totalorder %v306, 1
        %v414 = vsel %vm413, %v410, %v412
        %v415 = vsel %vm413, %v412, %v410
        %v418 = vrot.slane %v415, 2
        %v419 = vrot.slane %v414, 2
        %v422 = vmul.f32 %v407, %v418
        %v423 = vmul.f32 %v408, %v419
        %v426 = vrot.slane %v422, 6
        %v427 = vrot.slane %v423, 6
        %v430 = vsel %vm312, %v426, 0.0
        %v431 = vrot.slane %v430, 4
        %v432 = vadd.f32 %v430, %v431
        %v433 = vrot.slane %v432, 2
        %v434 = vadd.f32 %v432, %v433
        %v435 = vrot.slane %v434, 1
        %v436 = vadd.f32 %v434, %v435
        %v437 = vsel %vm312, %v427, 0.0
        %v438 = vrot.slane %v437, 4
        %v439 = vadd.f32 %v437, %v438
        %v440 = vrot.slane %v439, 2
        %v441 = vadd.f32 %v439, %v440
        %v442 = vrot.slane %v441, 1
        %v443 = vadd.f32 %v441, %v442
        %v444 = vadd.f32 %v405, %v436
        %v445 = vadd.f32 %v406, %v443
        %v446 = vld [vmem:[#allocation5 + $0x10] sm:$0x3]
        %v447 = vld [vmem:[#allocation5 + $0x18] sm:$0x3]
        %v448 = vmul.f32 %v446, %v297
        %v449 = vmul.f32 %v447, %v298
        %v450 = vsel %vm312, %v448, 0.0
        %v451 = vrot.slane %v450, 4
        %v452 = vadd.f32 %v450, %v451
        %v453 = vrot.slane %v452, 2
        %v454 = vadd.f32 %v452, %v453
        %v455 = vrot.slane %v454, 1
        %v456 = vadd.f32 %v454, %v455
        %v457 = vsel %vm312, %v449, 0.0
        %v458 = vrot.slane %v457, 4
        %v459 = vadd.f32 %v457, %v458
        %v460 = vrot.slane %v459, 2
        %v461 = vadd.f32 %v459, %v460
        %v462 = vrot.slane %v461, 1
        %v463 = vadd.f32 %v461, %v462
        %v464 = vadd.f32 %v444, %v456
        %v465 = vadd.f32 %v445, %v463
        %v466 = vld [vmem:[#allocation5 + $0x10] sm:$0xc]
        %v467 = vld [vmem:[#allocation5 + $0x18] sm:$0xc]
        %468 = vrot.lane.b32.xlu0 %v297, 127
        %v469 = vpop.permute.xlu0 %468
        %470 = vrot.lane.b32.xlu0 %v298, 127
        %v471 = vpop.permute.xlu0 %470
        %vm472 = vcmp.lt.s32.totalorder %v306, 127
        %v473 = vsel %vm472, %v469, %v471
        %v474 = vsel %vm472, %v471, %v469
        %v477 = vrot.slane %v473, 6
        %v478 = vrot.slane %v474, 6
        %v481 = vmul.f32 %v466, %v477
        %v482 = vmul.f32 %v467, %v478
        %v485 = vrot.slane %v481, 2
        %v486 = vrot.slane %v482, 2
        %v489 = vsel %vm312, %v485, 0.0
        %v490 = vrot.slane %v489, 4
        %v491 = vadd.f32 %v489, %v490
        %v492 = vrot.slane %v491, 2
        %v493 = vadd.f32 %v491, %v492
        %v494 = vrot.slane %v493, 1
        %v495 = vadd.f32 %v493, %v494
        %v496 = vsel %vm312, %v486, 0.0
        %v497 = vrot.slane %v496, 4
        %v498 = vadd.f32 %v496, %v497
        %v499 = vrot.slane %v498, 2
        %v500 = vadd.f32 %v498, %v499
        %v501 = vrot.slane %v500, 1
        %v502 = vadd.f32 %v500, %v501
        %v503 = vadd.f32 %v464, %v495
        %v504 = vadd.f32 %v465, %v502
        %v505 = vld [vmem:[#allocation5 + $0x10] sm:$0x30]
        %v506 = vld [vmem:[#allocation5 + $0x18] sm:$0x30]
        %507 = vrot.lane.b32.xlu0 %v297, 113
        %v508 = vpop.permute.xlu0 %507
        %509 = vrot.lane.b32.xlu0 %v298, 113
        %v510 = vpop.permute.xlu0 %509
        %vm511 = vcmp.lt.s32.totalorder %v306, 113
        %v512 = vsel %vm511, %v508, %v510
        %v513 = vsel %vm511, %v510, %v508
        %v516 = vrot.slane %v512, 4
        %v517 = vrot.slane %v513, 4
        %v520 = vmul.f32 %v505, %v516
        %v521 = vmul.f32 %v506, %v517
        %v524 = vrot.slane %v520, 4
        %v525 = vrot.slane %v521, 4
        %v528 = vsel %vm312, %v524, 0.0
        %v529 = vrot.slane %v528, 4
        %v530 = vadd.f32 %v528, %v529
        %v531 = vrot.slane %v530, 2
        %v532 = vadd.f32 %v530, %v531
        %v533 = vrot.slane %v532, 1
        %v534 = vadd.f32 %v532, %v533
        %v535 = vsel %vm312, %v525, 0.0
        %v536 = vrot.slane %v535, 4
        %v537 = vadd.f32 %v535, %v536
        %v538 = vrot.slane %v537, 2
        %v539 = vadd.f32 %v537, %v538
        %v540 = vrot.slane %v539, 1
        %v541 = vadd.f32 %v539, %v540
        %v542 = vadd.f32 %v503, %v534
        %v543 = vadd.f32 %v504, %v541
        %v544 = vld [vmem:[#allocation5 + $0x10] sm:$0xc0]
        %v545 = vld [vmem:[#allocation5 + $0x18] sm:$0xc0]
        %546 = vrot.lane.b32.xlu0 %v297, 112
        %v547 = vpop.permute.xlu0 %546
        %548 = vrot.lane.b32.xlu0 %v298, 112
        %v549 = vpop.permute.xlu0 %548
        %vm550 = vcmp.lt.s32.totalorder %v306, 112
        %v551 = vsel %vm550, %v547, %v549
        %v552 = vsel %vm550, %v549, %v547
        %v555 = vrot.slane %v551, 2
        %v556 = vrot.slane %v552, 2
        %v559 = vmul.f32 %v544, %v555
        %v560 = vmul.f32 %v545, %v556
        %v563 = vrot.slane %v559, 6
        %v564 = vrot.slane %v560, 6
        %v567 = vsel %vm312, %v563, 0.0
        %v568 = vrot.slane %v567, 4
        %v569 = vadd.f32 %v567, %v568
        %v570 = vrot.slane %v569, 2
        %v571 = vadd.f32 %v569, %v570
        %v572 = vrot.slane %v571, 1
        %v573 = vadd.f32 %v571, %v572
        %v574 = vsel %vm312, %v564, 0.0
        %v575 = vrot.slane %v574, 4
        %v576 = vadd.f32 %v574, %v575
        %v577 = vrot.slane %v576, 2
        %v578 = vadd.f32 %v576, %v577
        %v579 = vrot.slane %v578, 1
        %v580 = vadd.f32 %v578, %v579
        %v581 = vadd.f32 %v542, %v573
        %v582 = vadd.f32 %v543, %v580
        %v583 = vld [vmem:[#allocation5 + $0x20] sm:$0x3]
        %v584 = vld [vmem:[#allocation5 + $0x28] sm:$0x3]
        %585 = vrot.lane.b32.xlu0 %v297, 111
        %v586 = vpop.permute.xlu0 %585
        %587 = vrot.lane.b32.xlu0 %v298, 111
        %v588 = vpop.permute.xlu0 %587
        %vm589 = vcmp.lt.s32.totalorder %v306, 111
        %v590 = vsel %vm589, %v586, %v588
        %v591 = vsel %vm589, %v588, %v586
        %v592 = vmul.f32 %v583, %v590
        %v593 = vmul.f32 %v584, %v591
        %v594 = vsel %vm312, %v592, 0.0
        %v595 = vrot.slane %v594, 4
        %v596 = vadd.f32 %v594, %v595
        %v597 = vrot.slane %v596, 2
        %v598 = vadd.f32 %v596, %v597
        %v599 = vrot.slane %v598, 1
        %v600 = vadd.f32 %v598, %v599
        %v601 = vsel %vm312, %v593, 0.0
        %v602 = vrot.slane %v601, 4
        %v603 = vadd.f32 %v601, %v602
        %v604 = vrot.slane %v603, 2
        %v605 = vadd.f32 %v603, %v604
        %v606 = vrot.slane %v605, 1
        %v607 = vadd.f32 %v605, %v606
        %v608 = vadd.f32 %v581, %v600
        %v609 = vadd.f32 %v582, %v607
        %v610 = vld [vmem:[%s4] sm:$0xff]
        %v611 = vld [vmem:[#allocation7] sm:$0xf]
        %v612 = vld [vmem:[#allocation7 + $0x8] sm:$0xf]
        %613 = vrot.lane.b32.xlu0 %v608, 17
        %v614 = vpop.permute.xlu0 %613
        %615 = vrot.lane.b32.xlu0 %v609, 17
        %v616 = vpop.permute.xlu0 %615
        %v617 = vsel %vm307, %v614, %v616
        %v618 = vsel %vm307, %v616, %v614
        %v619 = vlaneseq
        %v620 = vshrl.u32 %v619, 7
        %v621 = vsub.s32 0, %v620
        %v622 = vrot.slane %v618, %v621
        %v623 = vlaneseq
        %v624 = vshrl.u32 %v623, 7
        %v625 = vsub.s32 0, %v624
        %v626 = vrot.slane %v617, %v625
        %v627 = vmul.f32 %v611, %v622
        %v628 = vmul.f32 %v612, %v626
        %v631 = vcombine.low %v627, %v628
        %v633 = vadd.f32 %v610, %v631
        %v634 = vld [vmem:[#allocation7] sm:$0xf0]
        %v635 = vld [vmem:[#allocation7 + $0x8] sm:$0xf0]
        %636 = vrot.lane.b32.xlu0 %v608, 16
        %v637 = vpop.permute.xlu0 %636
        %638 = vrot.lane.b32.xlu0 %v609, 16
        %v639 = vpop.permute.xlu0 %638
        %v640 = vsel %vm335, %v637, %v639
        %v641 = vsel %vm335, %v639, %v637
        %v642 = vlaneseq
        %v643 = vshrl.u32 %v642, 7
        %v644 = vsub.s32 0, %v643
        %v645 = vrot.slane %v641, %v644
        %v646 = vlaneseq
        %v647 = vshrl.u32 %v646, 7
        %v648 = vsub.s32 0, %v647
        %v649 = vrot.slane %v640, %v648
        %v650 = vmul.f32 %v634, %v645
        %v651 = vmul.f32 %v635, %v649
        %v654 = vcombine.high %v650, %v651
        %v656 = vadd.f32 %v633, %v654
        %v657 = vld [vmem:[#allocation7 + $0x10] sm:$0xf]
        %v658 = vld [vmem:[#allocation7 + $0x18] sm:$0xf]
        %659 = vrot.lane.b32.xlu0 %v608, 15
        %v660 = vpop.permute.xlu0 %659
        %661 = vrot.lane.b32.xlu0 %v609, 15
        %v662 = vpop.permute.xlu0 %661
        %v663 = vsel %vm374, %v660, %v662
        %v664 = vsel %vm374, %v662, %v660
        %v665 = vlaneseq
        %v666 = vshrl.u32 %v665, 7
        %v667 = vsub.s32 0, %v666
        %v668 = vrot.slane %v664, %v667
        %v669 = vlaneseq
        %v670 = vshrl.u32 %v669, 7
        %v671 = vsub.s32 0, %v670
        %v672 = vrot.slane %v663, %v671
        %v673 = vmul.f32 %v657, %v668
        %v674 = vmul.f32 %v658, %v672
        %v677 = vcombine.low %v673, %v674
        %v679 = vadd.f32 %v656, %v677
        %v680 = vld [vmem:[#allocation7 + $0x10] sm:$0xf0]
        %v681 = vld [vmem:[#allocation7 + $0x18] sm:$0xf0]
        %682 = vrot.lane.b32.xlu0 %v608, 1
        %v683 = vpop.permute.xlu0 %682
        %684 = vrot.lane.b32.xlu0 %v609, 1
        %v685 = vpop.permute.xlu0 %684
        %v686 = vsel %vm413, %v683, %v685
        %v687 = vsel %vm413, %v685, %v683
        %v688 = vlaneseq
        %v689 = vshrl.u32 %v688, 7
        %v690 = vsub.s32 0, %v689
        %v691 = vrot.slane %v687, %v690
        %v692 = vlaneseq
        %v693 = vshrl.u32 %v692, 7
        %v694 = vsub.s32 0, %v693
        %v695 = vrot.slane %v686, %v694
        %v696 = vmul.f32 %v680, %v691
        %v697 = vmul.f32 %v681, %v695
        %v700 = vcombine.high %v696, %v697
        %v702 = vadd.f32 %v679, %v700
        %v703 = vld [vmem:[#allocation7 + $0x20] sm:$0xf]
        %v704 = vld [vmem:[#allocation7 + $0x28] sm:$0xf]
        %v705 = vmul.f32 %v703, %v608
        %v706 = vmul.f32 %v704, %v609
        %v709 = vcombine.low %v705, %v706
        %v711 = vadd.f32 %v702, %v709
        %v712 = vld [vmem:[#allocation7 + $0x20] sm:$0xf0]
        %v713 = vld [vmem:[#allocation7 + $0x28] sm:$0xf0]
        %714 = vrot.lane.b32.xlu0 %v608, 127
        %v715 = vpop.permute.xlu0 %714
        %716 = vrot.lane.b32.xlu0 %v609, 127
        %v717 = vpop.permute.xlu0 %716
        %v718 = vsel %vm472, %v715, %v717
        %v719 = vsel %vm472, %v717, %v715
        %v720 = vlaneseq
        %v721 = vshrl.u32 %v720, 7
        %v722 = vsub.s32 0, %v721
        %v723 = vrot.slane %v718, %v722
        %v724 = vlaneseq
        %v725 = vshrl.u32 %v724, 7
        %v726 = vsub.s32 0, %v725
        %v727 = vrot.slane %v719, %v726
        %v728 = vmul.f32 %v712, %v723
        %v729 = vmul.f32 %v713, %v727
        %v732 = vcombine.high %v728, %v729
        %v734 = vadd.f32 %v711, %v732
        %v735 = vld [vmem:[#allocation7 + $0x30] sm:$0xf]
        %v736 = vld [vmem:[#allocation7 + $0x38] sm:$0xf]
        %737 = vrot.lane.b32.xlu0 %v608, 113
        %v738 = vpop.permute.xlu0 %737
        %739 = vrot.lane.b32.xlu0 %v609, 113
        %v740 = vpop.permute.xlu0 %739
        %v741 = vsel %vm511, %v738, %v740
        %v742 = vsel %vm511, %v740, %v738
        %v743 = vlaneseq
        %v744 = vshrl.u32 %v743, 7
        %v745 = vsub.s32 0, %v744
        %v746 = vrot.slane %v741, %v745
        %v747 = vlaneseq
        %v748 = vshrl.u32 %v747, 7
        %v749 = vsub.s32 0, %v748
        %v750 = vrot.slane %v742, %v749
        %v751 = vmul.f32 %v735, %v746
        %v752 = vmul.f32 %v736, %v750
        %v755 = vcombine.low %v751, %v752
        %v757 = vadd.f32 %v734, %v755
        %v758 = vld [vmem:[#allocation7 + $0x30] sm:$0xf0]
        %v759 = vld [vmem:[#allocation7 + $0x38] sm:$0xf0]
        %760 = vrot.lane.b32.xlu0 %v608, 112
        %v761 = vpop.permute.xlu0 %760
        %762 = vrot.lane.b32.xlu0 %v609, 112
        %v763 = vpop.permute.xlu0 %762
        %v764 = vsel %vm550, %v761, %v763
        %v765 = vsel %vm550, %v763, %v761
        %v766 = vlaneseq
        %v767 = vshrl.u32 %v766, 7
        %v768 = vsub.s32 0, %v767
        %v769 = vrot.slane %v764, %v768
        %v770 = vlaneseq
        %v771 = vshrl.u32 %v770, 7
        %v772 = vsub.s32 0, %v771
        %v773 = vrot.slane %v765, %v772
        %v774 = vmul.f32 %v758, %v769
        %v775 = vmul.f32 %v759, %v773
        %v778 = vcombine.high %v774, %v775
        %v780 = vadd.f32 %v757, %v778
        %v781 = vld [vmem:[#allocation7 + $0x40] sm:$0xf]
        %v782 = vld [vmem:[#allocation7 + $0x48] sm:$0xf]
        %783 = vrot.lane.b32.xlu0 %v608, 111
        %v784 = vpop.permute.xlu0 %783
        %785 = vrot.lane.b32.xlu0 %v609, 111
        %v786 = vpop.permute.xlu0 %785
        %v787 = vsel %vm589, %v784, %v786
        %v788 = vsel %vm589, %v786, %v784
        %v789 = vlaneseq
        %v790 = vshrl.u32 %v789, 7
        %v791 = vsub.s32 0, %v790
        %v792 = vrot.slane %v787, %v791
        %v793 = vlaneseq
        %v794 = vshrl.u32 %v793, 7
        %v795 = vsub.s32 0, %v794
        %v796 = vrot.slane %v788, %v795
        %v797 = vmul.f32 %v781, %v792
        %v798 = vmul.f32 %v782, %v796
        %v801 = vcombine.low %v797, %v798
        %v803 = vadd.f32 %v780, %v801
        %v805 = vcombine.high %v803, %v803
        %vm807 = vcmask 1043456
        %v808 = vsel %vm807, %v803, -inf
        %v809 = vrot.slane %v808, 4
        %v810 = vmax.f32 %v808, %v809
        %v811 = vrot.slane %v810, 2
        %v812 = vmax.f32 %v810, %v811
        %v813 = vrot.slane %v812, 1
        %v814 = vmax.f32 %v812, %v813
        %v815 = vsel %vm807, %v805, -inf
        %v816 = vrot.slane %v815, 4
        %v817 = vmax.f32 %v815, %v816
        %v818 = vrot.slane %v817, 2
        %v819 = vmax.f32 %v817, %v818
        %v820 = vrot.slane %v819, 1
        %v821 = vmax.f32 %v819, %v820
        %v822 = vld [vmem:[#allocation8] sm:$0xf]
        %v823 = vld [vmem:[#allocation8 + $0x8] sm:$0xf]
        %824 = vrot.lane.b32.xlu0 %v814, 17
        %v825 = vpop.permute.xlu0 %824
        %826 = vrot.lane.b32.xlu0 %v821, 17
        %v827 = vpop.permute.xlu0 %826
        %v828 = vsel %vm307, %v825, %v827
        %v829 = vsel %vm307, %v827, %v825
        %v830 = vlaneseq
        %v831 = vshrl.u32 %v830, 7
        %v832 = vsub.s32 0, %v831
        %v833 = vrot.slane %v829, %v832
        %v834 = vlaneseq
        %v835 = vshrl.u32 %v834, 7
        %v836 = vsub.s32 0, %v835
        %v837 = vrot.slane %v828, %v836
        %v838 = vmul.f32 %v822, %v833
        %v839 = vmul.f32 %v823, %v837
        %v842 = vcombine.low %v838, %v839
        %v844 = vadd.f32 %v803, %v842
        %v845 = vld [vmem:[#allocation8] sm:$0xf0]
        %v846 = vld [vmem:[#allocation8 + $0x8] sm:$0xf0]
        %847 = vrot.lane.b32.xlu0 %v814, 16
        %v848 = vpop.permute.xlu0 %847
        %849 = vrot.lane.b32.xlu0 %v821, 16
        %v850 = vpop.permute.xlu0 %849
        %v851 = vsel %vm335, %v848, %v850
        %v852 = vsel %vm335, %v850, %v848
        %v853 = vlaneseq
        %v854 = vshrl.u32 %v853, 7
        %v855 = vsub.s32 0, %v854
        %v856 = vrot.slane %v852, %v855
        %v857 = vlaneseq
        %v858 = vshrl.u32 %v857, 7
        %v859 = vsub.s32 0, %v858
        %v860 = vrot.slane %v851, %v859
        %v861 = vmul.f32 %v845, %v856
        %v862 = vmul.f32 %v846, %v860
        %v865 = vcombine.high %v861, %v862
        %v867 = vadd.f32 %v844, %v865
        %v868 = vld [vmem:[#allocation8 + $0x10] sm:$0xf]
        %v869 = vld [vmem:[#allocation8 + $0x18] sm:$0xf]
        %870 = vrot.lane.b32.xlu0 %v814, 15
        %v871 = vpop.permute.xlu0 %870
        %872 = vrot.lane.b32.xlu0 %v821, 15
        %v873 = vpop.permute.xlu0 %872
        %v874 = vsel %vm374, %v871, %v873
        %v875 = vsel %vm374, %v873, %v871
        %v876 = vlaneseq
        %v877 = vshrl.u32 %v876, 7
        %v878 = vsub.s32 0, %v877
        %v879 = vrot.slane %v875, %v878
        %v880 = vlaneseq
        %v881 = vshrl.u32 %v880, 7
        %v882 = vsub.s32 0, %v881
        %v883 = vrot.slane %v874, %v882
        %v884 = vmul.f32 %v868, %v879
        %v885 = vmul.f32 %v869, %v883
        %v888 = vcombine.low %v884, %v885
        %v890 = vadd.f32 %v867, %v888
        %v891 = vld [vmem:[#allocation8 + $0x10] sm:$0xf0]
        %v892 = vld [vmem:[#allocation8 + $0x18] sm:$0xf0]
        %893 = vrot.lane.b32.xlu0 %v814, 1
        %v894 = vpop.permute.xlu0 %893
        %895 = vrot.lane.b32.xlu0 %v821, 1
        %v896 = vpop.permute.xlu0 %895
        %v897 = vsel %vm413, %v894, %v896
        %v898 = vsel %vm413, %v896, %v894
        %v899 = vlaneseq
        %v900 = vshrl.u32 %v899, 7
        %v901 = vsub.s32 0, %v900
        %v902 = vrot.slane %v898, %v901
        %v903 = vlaneseq
        %v904 = vshrl.u32 %v903, 7
        %v905 = vsub.s32 0, %v904
        %v906 = vrot.slane %v897, %v905
        %v907 = vmul.f32 %v891, %v902
        %v908 = vmul.f32 %v892, %v906
        %v911 = vcombine.high %v907, %v908
        %v913 = vadd.f32 %v890, %v911
        %v914 = vld [vmem:[#allocation8 + $0x20] sm:$0xf]
        %v915 = vld [vmem:[#allocation8 + $0x28] sm:$0xf]
        %v916 = vmul.f32 %v914, %v814
        %v917 = vmul.f32 %v915, %v821
        %v920 = vcombine.low %v916, %v917
        %v922 = vadd.f32 %v913, %v920
        %v923 = vld [vmem:[#allocation8 + $0x20] sm:$0xf0]
        %v924 = vld [vmem:[#allocation8 + $0x28] sm:$0xf0]
        %925 = vrot.lane.b32.xlu0 %v814, 127
        %v926 = vpop.permute.xlu0 %925
        %927 = vrot.lane.b32.xlu0 %v821, 127
        %v928 = vpop.permute.xlu0 %927
        %v929 = vsel %vm472, %v926, %v928
        %v930 = vsel %vm472, %v928, %v926
        %v931 = vlaneseq
        %v932 = vshrl.u32 %v931, 7
        %v933 = vsub.s32 0, %v932
        %v934 = vrot.slane %v929, %v933
        %v935 = vlaneseq
        %v936 = vshrl.u32 %v935, 7
        %v937 = vsub.s32 0, %v936
        %v938 = vrot.slane %v930, %v937
        %v939 = vmul.f32 %v923, %v934
        %v940 = vmul.f32 %v924, %v938
        %v943 = vcombine.high %v939, %v940
        %v945 = vadd.f32 %v922, %v943
        %v946 = vld [vmem:[#allocation8 + $0x30] sm:$0xf]
        %v947 = vld [vmem:[#allocation8 + $0x38] sm:$0xf]
        %948 = vrot.lane.b32.xlu0 %v814, 113
        %v949 = vpop.permute.xlu0 %948
        %950 = vrot.lane.b32.xlu0 %v821, 113
        %v951 = vpop.permute.xlu0 %950
        %v952 = vsel %vm511, %v949, %v951
        %v953 = vsel %vm511, %v951, %v949
        %v954 = vlaneseq
        %v955 = vshrl.u32 %v954, 7
        %v956 = vsub.s32 0, %v955
        %v957 = vrot.slane %v952, %v956
        %v958 = vlaneseq
        %v959 = vshrl.u32 %v958, 7
        %v960 = vsub.s32 0, %v959
        %v961 = vrot.slane %v953, %v960
        %v962 = vmul.f32 %v946, %v957
        %v963 = vmul.f32 %v947, %v961
        %v966 = vcombine.low %v962, %v963
        %v968 = vadd.f32 %v945, %v966
        %v969 = vld [vmem:[#allocation8 + $0x30] sm:$0xf0]
        %v970 = vld [vmem:[#allocation8 + $0x38] sm:$0xf0]
        %971 = vrot.lane.b32.xlu0 %v814, 112
        %v972 = vpop.permute.xlu0 %971
        %973 = vrot.lane.b32.xlu0 %v821, 112
        %v974 = vpop.permute.xlu0 %973
        %v975 = vsel %vm550, %v972, %v974
        %v976 = vsel %vm550, %v974, %v972
        %v977 = vlaneseq
        %v978 = vshrl.u32 %v977, 7
        %v979 = vsub.s32 0, %v978
        %v980 = vrot.slane %v975, %v979
        %v981 = vlaneseq
        %v982 = vshrl.u32 %v981, 7
        %v983 = vsub.s32 0, %v982
        %v984 = vrot.slane %v976, %v983
        %v985 = vmul.f32 %v969, %v980
        %v986 = vmul.f32 %v970, %v984
        %v989 = vcombine.high %v985, %v986
        %v991 = vadd.f32 %v968, %v989
        %v992 = vld [vmem:[#allocation8 + $0x40] sm:$0xf]
        %v993 = vld [vmem:[#allocation8 + $0x48] sm:$0xf]
        %994 = vrot.lane.b32.xlu0 %v814, 111
        %v995 = vpop.permute.xlu0 %994
        %996 = vrot.lane.b32.xlu0 %v821, 111
        %v997 = vpop.permute.xlu0 %996
        %v998 = vsel %vm589, %v995, %v997
        %v999 = vsel %vm589, %v997, %v995
        %v1000 = vlaneseq
        %v1001 = vshrl.u32 %v1000, 7
        %v1002 = vsub.s32 0, %v1001
        %v1003 = vrot.slane %v998, %v1002
        %v1004 = vlaneseq
        %v1005 = vshrl.u32 %v1004, 7
        %v1006 = vsub.s32 0, %v1005
        %v1007 = vrot.slane %v999, %v1006
        %v1008 = vmul.f32 %v992, %v1003
        %v1009 = vmul.f32 %v993, %v1007
        %v1012 = vcombine.low %v1008, %v1009
        %v1014 = vadd.f32 %v991, %v1012
        %v1016 = vcombine.high %v1014, %v1014
        %v1018 = vsel %vm807, %v1014, -inf
        %v1019 = vrot.slane %v1018, 4
        %v1020 = vmax.f32 %v1018, %v1019
        %v1021 = vrot.slane %v1020, 2
        %v1022 = vmax.f32 %v1020, %v1021
        %v1023 = vrot.slane %v1022, 1
        %v1024 = vmax.f32 %v1022, %v1023
        %v1025 = vsel %vm807, %v1016, -inf
        %v1026 = vrot.slane %v1025, 4
        %v1027 = vmax.f32 %v1025, %v1026
        %v1028 = vrot.slane %v1027, 2
        %v1029 = vmax.f32 %v1027, %v1028
        %v1030 = vrot.slane %v1029, 1
        %v1031 = vmax.f32 %v1029, %v1030
        %1032 = vrot.lane.b32.xlu0 %v1024, 17
        %v1033 = vpop.permute.xlu0 %1032
        %1034 = vrot.lane.b32.xlu0 %v1031, 17
        %v1035 = vpop.permute.xlu0 %1034
        %v1036 = vsel %vm307, %v1033, %v1035
        %v1037 = vsel %vm307, %v1035, %v1033
        %v1038 = vlaneseq
        %v1039 = vshrl.u32 %v1038, 7
        %v1040 = vsub.s32 0, %v1039
        %v1041 = vrot.slane %v1037, %v1040
        %v1042 = vlaneseq
        %v1043 = vshrl.u32 %v1042, 7
        %v1044 = vsub.s32 0, %v1043
        %v1045 = vrot.slane %v1036, %v1044
        %v1046 = vmul.f32 %v822, %v1041
        %v1047 = vmul.f32 %v823, %v1045
        %v1050 = vcombine.low %v1046, %v1047
        %v1052 = vadd.f32 %v803, %v1050
        %1053 = vrot.lane.b32.xlu0 %v1024, 16
        %v1054 = vpop.permute.xlu0 %1053
        %1055 = vrot.lane.b32.xlu0 %v1031, 16
        %v1056 = vpop.permute.xlu0 %1055
        %v1057 = vsel %vm335, %v1054, %v1056
        %v1058 = vsel %vm335, %v1056, %v1054
        %v1059 = vlaneseq
        %v1060 = vshrl.u32 %v1059, 7
        %v1061 = vsub.s32 0, %v1060
        %v1062 = vrot.slane %v1058, %v1061
        %v1063 = vlaneseq
        %v1064 = vshrl.u32 %v1063, 7
        %v1065 = vsub.s32 0, %v1064
        %v1066 = vrot.slane %v1057, %v1065
        %v1067 = vmul.f32 %v845, %v1062
        %v1068 = vmul.f32 %v846, %v1066
        %v1071 = vcombine.high %v1067, %v1068
        %v1073 = vadd.f32 %v1052, %v1071
        %1074 = vrot.lane.b32.xlu0 %v1024, 15
        %v1075 = vpop.permute.xlu0 %1074
        %1076 = vrot.lane.b32.xlu0 %v1031, 15
        %v1077 = vpop.permute.xlu0 %1076
        %v1078 = vsel %vm374, %v1075, %v1077
        %v1079 = vsel %vm374, %v1077, %v1075
        %v1080 = vlaneseq
        %v1081 = vshrl.u32 %v1080, 7
        %v1082 = vsub.s32 0, %v1081
        %v1083 = vrot.slane %v1079, %v1082
        %v1084 = vlaneseq
        %v1085 = vshrl.u32 %v1084, 7
        %v1086 = vsub.s32 0, %v1085
        %v1087 = vrot.slane %v1078, %v1086
        %v1088 = vmul.f32 %v868, %v1083
        %v1089 = vmul.f32 %v869, %v1087
        %v1092 = vcombine.low %v1088, %v1089
        %v1094 = vadd.f32 %v1073, %v1092
        %1095 = vrot.lane.b32.xlu0 %v1024, 1
        %v1096 = vpop.permute.xlu0 %1095
        %1097 = vrot.lane.b32.xlu0 %v1031, 1
        %v1098 = vpop.permute.xlu0 %1097
        %v1099 = vsel %vm413, %v1096, %v1098
        %v1100 = vsel %vm413, %v1098, %v1096
        %v1101 = vlaneseq
        %v1102 = vshrl.u32 %v1101, 7
        %v1103 = vsub.s32 0, %v1102
        %v1104 = vrot.slane %v1100, %v1103
        %v1105 = vlaneseq
        %v1106 = vshrl.u32 %v1105, 7
        %v1107 = vsub.s32 0, %v1106
        %v1108 = vrot.slane %v1099, %v1107
        %v1109 = vmul.f32 %v891, %v1104
        %v1110 = vmul.f32 %v892, %v1108
        %v1113 = vcombine.high %v1109, %v1110
        %v1115 = vadd.f32 %v1094, %v1113
        %v1116 = vmul.f32 %v914, %v1024
        %v1117 = vmul.f32 %v915, %v1031
        %v1120 = vcombine.low %v1116, %v1117
        %v1122 = vadd.f32 %v1115, %v1120
        %1123 = vrot.lane.b32.xlu0 %v1024, 127
        %v1124 = vpop.permute.xlu0 %1123
        %1125 = vrot.lane.b32.xlu0 %v1031, 127
        %v1126 = vpop.permute.xlu0 %1125
        %v1127 = vsel %vm472, %v1124, %v1126
        %v1128 = vsel %vm472, %v1126, %v1124
        %v1129 = vlaneseq
        %v1130 = vshrl.u32 %v1129, 7
        %v1131 = vsub.s32 0, %v1130
        %v1132 = vrot.slane %v1127, %v1131
        %v1133 = vlaneseq
        %v1134 = vshrl.u32 %v1133, 7
        %v1135 = vsub.s32 0, %v1134
        %v1136 = vrot.slane %v1128, %v1135
        %v1137 = vmul.f32 %v923, %v1132
        %v1138 = vmul.f32 %v924, %v1136
        %v1141 = vcombine.high %v1137, %v1138
        %v1143 = vadd.f32 %v1122, %v1141
        %1144 = vrot.lane.b32.xlu0 %v1024, 113
        %v1145 = vpop.permute.xlu0 %1144
        %1146 = vrot.lane.b32.xlu0 %v1031, 113
        %v1147 = vpop.permute.xlu0 %1146
        %v1148 = vsel %vm511, %v1145, %v1147
        %v1149 = vsel %vm511, %v1147, %v1145
        %v1150 = vlaneseq
        %v1151 = vshrl.u32 %v1150, 7
        %v1152 = vsub.s32 0, %v1151
        %v1153 = vrot.slane %v1148, %v1152
        %v1154 = vlaneseq
        %v1155 = vshrl.u32 %v1154, 7
        %v1156 = vsub.s32 0, %v1155
        %v1157 = vrot.slane %v1149, %v1156
        %v1158 = vmul.f32 %v946, %v1153
        %v1159 = vmul.f32 %v947, %v1157
        %v1162 = vcombine.low %v1158, %v1159
        %v1164 = vadd.f32 %v1143, %v1162
        %1165 = vrot.lane.b32.xlu0 %v1024, 112
        %v1166 = vpop.permute.xlu0 %1165
        %1167 = vrot.lane.b32.xlu0 %v1031, 112
        %v1168 = vpop.permute.xlu0 %1167
        %v1169 = vsel %vm550, %v1166, %v1168
        %v1170 = vsel %vm550, %v1168, %v1166
        %v1171 = vlaneseq
        %v1172 = vshrl.u32 %v1171, 7
        %v1173 = vsub.s32 0, %v1172
        %v1174 = vrot.slane %v1169, %v1173
        %v1175 = vlaneseq
        %v1176 = vshrl.u32 %v1175, 7
        %v1177 = vsub.s32 0, %v1176
        %v1178 = vrot.slane %v1170, %v1177
        %v1179 = vmul.f32 %v969, %v1174
        %v1180 = vmul.f32 %v970, %v1178
        %v1183 = vcombine.high %v1179, %v1180
        %v1185 = vadd.f32 %v1164, %v1183
        %1186 = vrot.lane.b32.xlu0 %v1024, 111
        %v1187 = vpop.permute.xlu0 %1186
        %1188 = vrot.lane.b32.xlu0 %v1031, 111
        %v1189 = vpop.permute.xlu0 %1188
        %v1190 = vsel %vm589, %v1187, %v1189
        %v1191 = vsel %vm589, %v1189, %v1187
        %v1192 = vlaneseq
        %v1193 = vshrl.u32 %v1192, 7
        %v1194 = vsub.s32 0, %v1193
        %v1195 = vrot.slane %v1190, %v1194
        %v1196 = vlaneseq
        %v1197 = vshrl.u32 %v1196, 7
        %v1198 = vsub.s32 0, %v1197
        %v1199 = vrot.slane %v1191, %v1198
        %v1200 = vmul.f32 %v992, %v1195
        %v1201 = vmul.f32 %v993, %v1199
        %v1204 = vcombine.low %v1200, %v1201
        %v1206 = vadd.f32 %v1185, %v1204
        %v1208 = vcombine.high %v1206, %v1206
        %v1210 = vsel %vm807, %v1206, -inf
        %v1211 = vrot.slane %v1210, 4
        %v1212 = vmax.f32 %v1210, %v1211
        %v1213 = vrot.slane %v1212, 2
        %v1214 = vmax.f32 %v1212, %v1213
        %v1215 = vrot.slane %v1214, 1
        %v1216 = vmax.f32 %v1214, %v1215
        %v1217 = vsel %vm807, %v1208, -inf
        %v1218 = vrot.slane %v1217, 4
        %v1219 = vmax.f32 %v1217, %v1218
        %v1220 = vrot.slane %v1219, 2
        %v1221 = vmax.f32 %v1219, %v1220
        %v1222 = vrot.slane %v1221, 1
        %v1223 = vmax.f32 %v1221, %v1222
        %1224 = vrot.lane.b32.xlu0 %v1216, 17
        %v1225 = vpop.permute.xlu0 %1224
        %1226 = vrot.lane.b32.xlu0 %v1223, 17
        %v1227 = vpop.permute.xlu0 %1226
        %v1228 = vsel %vm307, %v1225, %v1227
        %v1229 = vsel %vm307, %v1227, %v1225
        %v1230 = vlaneseq
        %v1231 = vshrl.u32 %v1230, 7
        %v1232 = vsub.s32 0, %v1231
        %v1233 = vrot.slane %v1229, %v1232
        %v1234 = vlaneseq
        %v1235 = vshrl.u32 %v1234, 7
        %v1236 = vsub.s32 0, %v1235
        %v1237 = vrot.slane %v1228, %v1236
        %v1238 = vmul.f32 %v822, %v1233
        %v1239 = vmul.f32 %v823, %v1237
        %v1242 = vcombine.low %v1238, %v1239
        %v1244 = vadd.f32 %v803, %v1242
        %1245 = vrot.lane.b32.xlu0 %v1216, 16
        %v1246 = vpop.permute.xlu0 %1245
        %1247 = vrot.lane.b32.xlu0 %v1223, 16
        %v1248 = vpop.permute.xlu0 %1247
        %v1249 = vsel %vm335, %v1246, %v1248
        %v1250 = vsel %vm335, %v1248, %v1246
        %v1251 = vlaneseq
        %v1252 = vshrl.u32 %v1251, 7
        %v1253 = vsub.s32 0, %v1252
        %v1254 = vrot.slane %v1250, %v1253
        %v1255 = vlaneseq
        %v1256 = vshrl.u32 %v1255, 7
        %v1257 = vsub.s32 0, %v1256
        %v1258 = vrot.slane %v1249, %v1257
        %v1259 = vmul.f32 %v845, %v1254
        %v1260 = vmul.f32 %v846, %v1258
        %v1263 = vcombine.high %v1259, %v1260
        %v1265 = vadd.f32 %v1244, %v1263
        %1266 = vrot.lane.b32.xlu0 %v1216, 15
        %v1267 = vpop.permute.xlu0 %1266
        %1268 = vrot.lane.b32.xlu0 %v1223, 15
        %v1269 = vpop.permute.xlu0 %1268
        %v1270 = vsel %vm374, %v1267, %v1269
        %v1271 = vsel %vm374, %v1269, %v1267
        %v1272 = vlaneseq
        %v1273 = vshrl.u32 %v1272, 7
        %v1274 = vsub.s32 0, %v1273
        %v1275 = vrot.slane %v1271, %v1274
        %v1276 = vlaneseq
        %v1277 = vshrl.u32 %v1276, 7
        %v1278 = vsub.s32 0, %v1277
        %v1279 = vrot.slane %v1270, %v1278
        %v1280 = vmul.f32 %v868, %v1275
        %v1281 = vmul.f32 %v869, %v1279
        %v1284 = vcombine.low %v1280, %v1281
        %v1286 = vadd.f32 %v1265, %v1284
        %1287 = vrot.lane.b32.xlu0 %v1216, 1
        %v1288 = vpop.permute.xlu0 %1287
        %1289 = vrot.lane.b32.xlu0 %v1223, 1
        %v1290 = vpop.permute.xlu0 %1289
        %v1291 = vsel %vm413, %v1288, %v1290
        %v1292 = vsel %vm413, %v1290, %v1288
        %v1293 = vlaneseq
        %v1294 = vshrl.u32 %v1293, 7
        %v1295 = vsub.s32 0, %v1294
        %v1296 = vrot.slane %v1292, %v1295
        %v1297 = vlaneseq
        %v1298 = vshrl.u32 %v1297, 7
        %v1299 = vsub.s32 0, %v1298
        %v1300 = vrot.slane %v1291, %v1299
        %v1301 = vmul.f32 %v891, %v1296
        %v1302 = vmul.f32 %v892, %v1300
        %v1305 = vcombine.high %v1301, %v1302
        %v1307 = vadd.f32 %v1286, %v1305
        %v1308 = vmul.f32 %v914, %v1216
        %v1309 = vmul.f32 %v915, %v1223
        %v1312 = vcombine.low %v1308, %v1309
        %v1314 = vadd.f32 %v1307, %v1312
        %1315 = vrot.lane.b32.xlu0 %v1216, 127
        %v1316 = vpop.permute.xlu0 %1315
        %1317 = vrot.lane.b32.xlu0 %v1223, 127
        %v1318 = vpop.permute.xlu0 %1317
        %v1319 = vsel %vm472, %v1316, %v1318
        %v1320 = vsel %vm472, %v1318, %v1316
        %v1321 = vlaneseq
        %v1322 = vshrl.u32 %v1321, 7
        %v1323 = vsub.s32 0, %v1322
        %v1324 = vrot.slane %v1319, %v1323
        %v1325 = vlaneseq
        %v1326 = vshrl.u32 %v1325, 7
        %v1327 = vsub.s32 0, %v1326
        %v1328 = vrot.slane %v1320, %v1327
        %v1329 = vmul.f32 %v923, %v1324
        %v1330 = vmul.f32 %v924, %v1328
        %v1333 = vcombine.high %v1329, %v1330
        %v1335 = vadd.f32 %v1314, %v1333
        %1336 = vrot.lane.b32.xlu0 %v1216, 113
        %v1337 = vpop.permute.xlu0 %1336
        %1338 = vrot.lane.b32.xlu0 %v1223, 113
        %v1339 = vpop.permute.xlu0 %1338
        %v1340 = vsel %vm511, %v1337, %v1339
        %v1341 = vsel %vm511, %v1339, %v1337
        %v1342 = vlaneseq
        %v1343 = vshrl.u32 %v1342, 7
        %v1344 = vsub.s32 0, %v1343
        %v1345 = vrot.slane %v1340, %v1344
        %v1346 = vlaneseq
        %v1347 = vshrl.u32 %v1346, 7
        %v1348 = vsub.s32 0, %v1347
        %v1349 = vrot.slane %v1341, %v1348
        %v1350 = vmul.f32 %v946, %v1345
        %v1351 = vmul.f32 %v947, %v1349
        %v1354 = vcombine.low %v1350, %v1351
        %v1356 = vadd.f32 %v1335, %v1354
        %1357 = vrot.lane.b32.xlu0 %v1216, 112
        %v1358 = vpop.permute.xlu0 %1357
        %1359 = vrot.lane.b32.xlu0 %v1223, 112
        %v1360 = vpop.permute.xlu0 %1359
        %v1361 = vsel %vm550, %v1358, %v1360
        %v1362 = vsel %vm550, %v1360, %v1358
        %v1363 = vlaneseq
        %v1364 = vshrl.u32 %v1363, 7
        %v1365 = vsub.s32 0, %v1364
        %v1366 = vrot.slane %v1361, %v1365
        %v1367 = vlaneseq
        %v1368 = vshrl.u32 %v1367, 7
        %v1369 = vsub.s32 0, %v1368
        %v1370 = vrot.slane %v1362, %v1369
        %v1371 = vmul.f32 %v969, %v1366
        %v1372 = vmul.f32 %v970, %v1370
        %v1375 = vcombine.high %v1371, %v1372
        %v1377 = vadd.f32 %v1356, %v1375
        %1378 = vrot.lane.b32.xlu0 %v1216, 111
        %v1379 = vpop.permute.xlu0 %1378
        %1380 = vrot.lane.b32.xlu0 %v1223, 111
        %v1381 = vpop.permute.xlu0 %1380
        %v1382 = vsel %vm589, %v1379, %v1381
        %v1383 = vsel %vm589, %v1381, %v1379
        %v1384 = vlaneseq
        %v1385 = vshrl.u32 %v1384, 7
        %v1386 = vsub.s32 0, %v1385
        %v1387 = vrot.slane %v1382, %v1386
        %v1388 = vlaneseq
        %v1389 = vshrl.u32 %v1388, 7
        %v1390 = vsub.s32 0, %v1389
        %v1391 = vrot.slane %v1383, %v1390
        %v1392 = vmul.f32 %v992, %v1387
        %v1393 = vmul.f32 %v993, %v1391
        %v1396 = vcombine.low %v1392, %v1393
        %v1398 = vadd.f32 %v1377, %v1396
        %v1400 = vcombine.high %v1398, %v1398
        %v1402 = vsel %vm807, %v1398, -inf
        %v1403 = vrot.slane %v1402, 4
        %v1404 = vmax.f32 %v1402, %v1403
        %v1405 = vrot.slane %v1404, 2
        %v1406 = vmax.f32 %v1404, %v1405
        %v1407 = vrot.slane %v1406, 1
        %v1408 = vmax.f32 %v1406, %v1407
        %v1409 = vsel %vm807, %v1400, -inf
        %v1410 = vrot.slane %v1409, 4
        %v1411 = vmax.f32 %v1409, %v1410
        %v1412 = vrot.slane %v1411, 2
        %v1413 = vmax.f32 %v1411, %v1412
        %v1414 = vrot.slane %v1413, 1
        %v1415 = vmax.f32 %v1413, %v1414
        %1416 = vrot.lane.b32.xlu0 %v1408, 17
        %v1417 = vpop.permute.xlu0 %1416
        %1418 = vrot.lane.b32.xlu0 %v1415, 17
        %v1419 = vpop.permute.xlu0 %1418
        %v1420 = vsel %vm307, %v1417, %v1419
        %v1421 = vsel %vm307, %v1419, %v1417
        %v1422 = vlaneseq
        %v1423 = vshrl.u32 %v1422, 7
        %v1424 = vsub.s32 0, %v1423
        %v1425 = vrot.slane %v1421, %v1424
        %v1426 = vlaneseq
        %v1427 = vshrl.u32 %v1426, 7
        %v1428 = vsub.s32 0, %v1427
        %v1429 = vrot.slane %v1420, %v1428
        %v1430 = vmul.f32 %v822, %v1425
        %v1431 = vmul.f32 %v823, %v1429
        %v1434 = vcombine.low %v1430, %v1431
        %v1436 = vadd.f32 %v803, %v1434
        %1437 = vrot.lane.b32.xlu0 %v1408, 16
        %v1438 = vpop.permute.xlu0 %1437
        %1439 = vrot.lane.b32.xlu0 %v1415, 16
        %v1440 = vpop.permute.xlu0 %1439
        %v1441 = vsel %vm335, %v1438, %v1440
        %v1442 = vsel %vm335, %v1440, %v1438
        %v1443 = vlaneseq
        %v1444 = vshrl.u32 %v1443, 7
        %v1445 = vsub.s32 0, %v1444
        %v1446 = vrot.slane %v1442, %v1445
        %v1447 = vlaneseq
        %v1448 = vshrl.u32 %v1447, 7
        %v1449 = vsub.s32 0, %v1448
        %v1450 = vrot.slane %v1441, %v1449
        %v1451 = vmul.f32 %v845, %v1446
        %v1452 = vmul.f32 %v846, %v1450
        %v1455 = vcombine.high %v1451, %v1452
        %v1457 = vadd.f32 %v1436, %v1455
        %1458 = vrot.lane.b32.xlu0 %v1408, 15
        %v1459 = vpop.permute.xlu0 %1458
        %1460 = vrot.lane.b32.xlu0 %v1415, 15
        %v1461 = vpop.permute.xlu0 %1460
        %v1462 = vsel %vm374, %v1459, %v1461
        %v1463 = vsel %vm374, %v1461, %v1459
        %v1464 = vlaneseq
        %v1465 = vshrl.u32 %v1464, 7
        %v1466 = vsub.s32 0, %v1465
        %v1467 = vrot.slane %v1463, %v1466
        %v1468 = vlaneseq
        %v1469 = vshrl.u32 %v1468, 7
        %v1470 = vsub.s32 0, %v1469
        %v1471 = vrot.slane %v1462, %v1470
        %v1472 = vmul.f32 %v868, %v1467
        %v1473 = vmul.f32 %v869, %v1471
        %v1476 = vcombine.low %v1472, %v1473
        %v1478 = vadd.f32 %v1457, %v1476
        %1479 = vrot.lane.b32.xlu0 %v1408, 1
        %v1480 = vpop.permute.xlu0 %1479
        %1481 = vrot.lane.b32.xlu0 %v1415, 1
        %v1482 = vpop.permute.xlu0 %1481
        %v1483 = vsel %vm413, %v1480, %v1482
        %v1484 = vsel %vm413, %v1482, %v1480
        %v1485 = vlaneseq
        %v1486 = vshrl.u32 %v1485, 7
        %v1487 = vsub.s32 0, %v1486
        %v1488 = vrot.slane %v1484, %v1487
        %v1489 = vlaneseq
        %v1490 = vshrl.u32 %v1489, 7
        %v1491 = vsub.s32 0, %v1490
        %v1492 = vrot.slane %v1483, %v1491
        %v1493 = vmul.f32 %v891, %v1488
        %v1494 = vmul.f32 %v892, %v1492
        %v1497 = vcombine.high %v1493, %v1494
        %v1499 = vadd.f32 %v1478, %v1497
        %v1500 = vmul.f32 %v914, %v1408
        %v1501 = vmul.f32 %v915, %v1415
        %v1504 = vcombine.low %v1500, %v1501
        %v1506 = vadd.f32 %v1499, %v1504
        %1507 = vrot.lane.b32.xlu0 %v1408, 127
        %v1508 = vpop.permute.xlu0 %1507
        %1509 = vrot.lane.b32.xlu0 %v1415, 127
        %v1510 = vpop.permute.xlu0 %1509
        %v1511 = vsel %vm472, %v1508, %v1510
        %v1512 = vsel %vm472, %v1510, %v1508
        %v1513 = vlaneseq
        %v1514 = vshrl.u32 %v1513, 7
        %v1515 = vsub.s32 0, %v1514
        %v1516 = vrot.slane %v1511, %v1515
        %v1517 = vlaneseq
        %v1518 = vshrl.u32 %v1517, 7
        %v1519 = vsub.s32 0, %v1518
        %v1520 = vrot.slane %v1512, %v1519
        %v1521 = vmul.f32 %v923, %v1516
        %v1522 = vmul.f32 %v924, %v1520
        %v1525 = vcombine.high %v1521, %v1522
        %v1527 = vadd.f32 %v1506, %v1525
        %1528 = vrot.lane.b32.xlu0 %v1408, 113
        %v1529 = vpop.permute.xlu0 %1528
        %1530 = vrot.lane.b32.xlu0 %v1415, 113
        %v1531 = vpop.permute.xlu0 %1530
        %v1532 = vsel %vm511, %v1529, %v1531
        %v1533 = vsel %vm511, %v1531, %v1529
        %v1534 = vlaneseq
        %v1535 = vshrl.u32 %v1534, 7
        %v1536 = vsub.s32 0, %v1535
        %v1537 = vrot.slane %v1532, %v1536
        %v1538 = vlaneseq
        %v1539 = vshrl.u32 %v1538, 7
        %v1540 = vsub.s32 0, %v1539
        %v1541 = vrot.slane %v1533, %v1540
        %v1542 = vmul.f32 %v946, %v1537
        %v1543 = vmul.f32 %v947, %v1541
        %v1546 = vcombine.low %v1542, %v1543
        %v1548 = vadd.f32 %v1527, %v1546
        %1549 = vrot.lane.b32.xlu0 %v1408, 112
        %v1550 = vpop.permute.xlu0 %1549
        %1551 = vrot.lane.b32.xlu0 %v1415, 112
        %v1552 = vpop.permute.xlu0 %1551
        %v1553 = vsel %vm550, %v1550, %v1552
        %v1554 = vsel %vm550, %v1552, %v1550
        %v1555 = vlaneseq
        %v1556 = vshrl.u32 %v1555, 7
        %v1557 = vsub.s32 0, %v1556
        %v1558 = vrot.slane %v1553, %v1557
        %v1559 = vlaneseq
        %v1560 = vshrl.u32 %v1559, 7
        %v1561 = vsub.s32 0, %v1560
        %v1562 = vrot.slane %v1554, %v1561
        %v1563 = vmul.f32 %v969, %v1558
        %v1564 = vmul.f32 %v970, %v1562
        %v1567 = vcombine.high %v1563, %v1564
        %v1569 = vadd.f32 %v1548, %v1567
        %1570 = vrot.lane.b32.xlu0 %v1408, 111
        %v1571 = vpop.permute.xlu0 %1570
        %1572 = vrot.lane.b32.xlu0 %v1415, 111
        %v1573 = vpop.permute.xlu0 %1572
        %v1574 = vsel %vm589, %v1571, %v1573
        %v1575 = vsel %vm589, %v1573, %v1571
        %v1576 = vlaneseq
        %v1577 = vshrl.u32 %v1576, 7
        %v1578 = vsub.s32 0, %v1577
        %v1579 = vrot.slane %v1574, %v1578
        %v1580 = vlaneseq
        %v1581 = vshrl.u32 %v1580, 7
        %v1582 = vsub.s32 0, %v1581
        %v1583 = vrot.slane %v1575, %v1582
        %v1584 = vmul.f32 %v992, %v1579
        %v1585 = vmul.f32 %v993, %v1583
        %v1588 = vcombine.low %v1584, %v1585
        %v1590 = vadd.f32 %v1569, %v1588
        %v1592 = vcombine.high %v1590, %v1590
        %v1594 = vsel %vm807, %v1590, -inf
        %v1595 = vrot.slane %v1594, 4
        %v1596 = vmax.f32 %v1594, %v1595
        %v1597 = vrot.slane %v1596, 2
        %v1598 = vmax.f32 %v1596, %v1597
        %v1599 = vrot.slane %v1598, 1
        %v1600 = vmax.f32 %v1598, %v1599
        %v1601 = vsel %vm807, %v1592, -inf
        %v1602 = vrot.slane %v1601, 4
        %v1603 = vmax.f32 %v1601, %v1602
        %v1604 = vrot.slane %v1603, 2
        %v1605 = vmax.f32 %v1603, %v1604
        %v1606 = vrot.slane %v1605, 1
        %v1607 = vmax.f32 %v1605, %v1606
        %v1610 = vcombine.low %v1600, %v1607
        %v1612 = vunpack.c.l.s4 1966171168
        %v1613 = vunpack.c.0.s8 %v1612
        %v1614 = vlaneseq
        %v1615 = vshrl.u32 %v1614, 7
        %v1616 = vsub.s32 %v1613, %v1615
        %v1617 = vrot.slane %v1610, %v1616
        %v1619 = vunpack.c.l.s4 1966171168
        %v1620 = vunpack.c.0.s8 %v1619
        %v1621 = vlaneseq
        %v1622 = vshrl.u32 %v1621, 7
        %v1623 = vsub.s32 %v1620, %v1622
        %v1624 = vrot.slane %v1617, %v1623
        %v1626 = vlaneseq
        %vm1627 = vcmp.ge.s32.totalorder %v1626, 0
        %vm1628 = vcmp.lt.s32.totalorder %v1626, 256
        %vm1629 = vmand %vm1627, %vm1628
        %1630 = vst.msk [vmem:[%s284] sm:$0x3] %vm1629, %v1624
        %s1631 = sand.u32 %s142, 1
        %s1632 = scalar_lea.sflag [#allocation4], %s1631
        %s1633 = sand.u32 %s142, 1
        %s1634 = smul.addr %s1633, 2
        %s1635 = scalar_lea.vmem [#allocation10], %s1634
        // Predicated region
        $region57: #{tpu_custom_call.1} parent=39 // pred_check
          %p1636 = pneg %p152
        $region58: #{tpu_custom_call.1} parent=39 // pred_check_branch
          %1638 = sbr.rel (%p1636) target = $region60
        $region59: #{tpu_custom_call.1} parent=39 // pred_region
          %s1639 = smul.u32 2, %s24
          %s1641 = ssub.s32 32, 32
          %1642 = vsyncadd %s1632, %s1641
          %s1643 = smul.addr %s1639, 16
          %s1644 = scalar_lea.hbm %s5, %s1643
          %s1646 = sshll.u32 %s1635, 4
          %s1647 = int_to_ptr.vmem [resolvable:$true] %s1646
          %1649 = dma.vmem_to_hbm [thread:$0]  %s1647, 32, %s1644, %s1632
        $region60: #{tpu_custom_call.1} parent=39 // pred_fallthru
          _
      $region40: #{tpu_custom_call.1} parent=5 // pred_fallthru
        _
      %p1650 = scmp.le.s32.totalorder 2, %s19
      // Predicated region
      $region61: #{tpu_custom_call.1} parent=5 // pred_check
        %p1651 = pneg %p1650
      $region62: #{tpu_custom_call.1} parent=5 // pred_check_branch
        %1653 = sbr.rel (%p1651) target = $region64
      $region63: #{tpu_custom_call.1} parent=5 // pred_region
        %s1654 = ssub.s32 %s19, 2
        // Predicated region
        $region65: #{tpu_custom_call.1} parent=63 // pred_check
          %p1655 = pneg %p158
        $region66: #{tpu_custom_call.1} parent=63 // pred_check_branch
          %1657 = sbr.rel (%p1655) target = $region68
        $region67: #{tpu_custom_call.1} parent=63 // pred_region
          %s1658 = sand.u32 %s143, 1
          %s1659 = scalar_lea.sflag [#allocation4], %s1658
          %s1660 = sand.u32 %s143, 1
          %s1661 = smul.addr %s1660, 2
          %s1662 = scalar_lea.vmem [#allocation10], %s1661
          %1663 = dma.done %s1659, 32
        $region68: #{tpu_custom_call.1} parent=63 // pred_fallthru
          _
      $region64: #{tpu_custom_call.1} parent=5 // pred_fallthru
        _
    $region6: #{tpu_custom_call.1} parent=1 // loop_footer
      %s23 = sadd.s32 1, %s19
    $region7: #{tpu_custom_call.1} parent=1 // loop_footer_branch
      %18 = sbr.rel target = $region3
    $region8: #{tpu_custom_call.1} parent=1 // loop_exit
      _
    %1664 = vsyncpa [#allocation3], 1
    %s1665 = scalar_lea.sflag [#allocation3], 1
    %1666 = vsyncpa %s1665, 1
    %1667 = vsyncpa [#allocation6], 1
    %1668 = vsyncpa [#allocation9], 1
    %1669 = vsyncpa [#allocation4], 1
    %s1670 = scalar_lea.sflag [#allocation4], 1
    %1671 = vsyncpa %s1670, 1

</llo_original>
